<compile_context>
chip_gen: v7x
topology: tpu7x:2x2x1
jax: 0.10.0
libtpu: 0.0.40
codegen_flags: <defaults>
</compile_context>

<pallas_src>
import functools

import jax
import jax.numpy as jnp
from jax.experimental import pallas as pl
from jax.experimental.pallas import tpu as pltpu

LANE = 128


def _ds(start, size, stride):
    # avoid emitting strided slices when stride == 1
    return pl.ds(start, size) if stride == 1 else pl.ds(start, size, stride)


def _conv_relu_kernel(x_ref, w_ref, b_ref, o_ref, *, kh_sz, kw_sz, stride, dilation):
    # x_ref: (1, 1, Hp, Wp, Cin_g)     spatially padded NHWC input (one batch, one group)
    # w_ref: (1, KH*KW*Cin_g, TCO)     tap-packed (im2col) filter tile
    # b_ref: (1, 1, TCO)               bias tile (float32)
    # o_ref: (1, 1, TH, Wo, TCO)       lane-dense output tile
    sh, sw = stride
    dh, dw = dilation
    _, _, th, wo, tco = o_ref.shape
    cin_g = x_ref.shape[-1]
    kpack = kh_sz * kw_sz * cin_g

    hi = pl.program_id(3)                                     # spatial (Ho) tile index
    row0 = pl.multiple_of(hi * (th * sh), th * sh)            # first padded input row

    # im2col: gather all KH*KW taps into the contraction dimension (order kh, kw, ci
    # matches the wrapper's weight flattening).
    taps = []
    for kh in range(kh_sz):
        for kw in range(kw_sz):
            taps.append(
                x_ref[0, 0,
                      _ds(row0 + kh * dh, th, sh),
                      _ds(kw * dw, wo, sw),
                      :])                                     # (TH, Wo, Cin_g)
    patch = taps[0] if len(taps) == 1 else jnp.concatenate(taps, axis=-1)
    lhs = patch.reshape(th * wo, kpack)                       # (M, K)

    # single MXU matmul, f32 accumulation
    acc = jnp.dot(lhs, w_ref[0], preferred_element_type=jnp.float32)   # (M, TCO)
    out = acc + b_ref[0]                                      # bias add in f32
    out = jnp.maximum(out, 0.0)                               # fused ReLU
    o_ref[...] = out.reshape(1, 1, th, wo, tco).astype(o_ref.dtype)


def conv2d_relu(x_nchw, weight_oihw, bias, stride=(1, 1), padding=(1, 1),
                dilation=(1, 1), groups=1, compute_dtype=None):
    """Fused conv2d + ReLU. PyTorch NCHW convention in and out."""
    n, cin, h, w = x_nchw.shape
    cout, cin_g, kh, kw = weight_oihw.shape
    sh, sw = stride
    ph, pw = padding
    dh, dw = dilation
    assert cin == cin_g * groups
    assert cout % groups == 0
    cout_g = cout // groups

    if bias is None:
        bias = jnp.zeros((cout,), jnp.float32)

    ho = (h + 2 * ph - dh * (kh - 1) - 1) // sh + 1
    wo = (w + 2 * pw - dw * (kw - 1) - 1) // sw + 1

    if compute_dtype is None:
        compute_dtype = x_nchw.dtype     # keep PyTorch-f32 semantics unless asked

    # ---- tile sizes --------------------------------------------------------
    cout_g_pad = max(LANE, -(-cout_g // LANE) * LANE)         # lane-dense Cout
    tco = 256 if cout_g_pad % 256 == 0 else 128               # MXU-aligned N tile
    n_co = cout_g_pad // tco
    # spatial H tile: largest divisor of Ho with TH*Wo <= 512 (MXU-friendly M tile)
    th = 1
    for cand in range(1, ho + 1):
        if ho % cand == 0 and cand * wo <= 512:
            th = cand
    n_ho = ho // th

    # ---- layout glue (plain JAX; the NCHW API of the module is preserved) ---
    # TODO(synk): in an NHWC end-to-end model these transposes (and the pad, via
    # in-kernel border masking) could be dropped to save wrapper HBM round trips.
    x_nhwc = jnp.transpose(x_nchw, (0, 2, 3, 1))
    x_pad = jnp.pad(x_nhwc, ((0, 0), (ph, ph), (pw, pw), (0, 0)))
    hp, wp = h + 2 * ph, w + 2 * pw
    if groups == 1:
        x_g = x_pad.reshape(n, 1, hp, wp, cin)
    else:
        x_g = jnp.transpose(x_pad.reshape(n, hp, wp, groups, cin_g),
                            (0, 3, 1, 2, 4))                  # (N, G, Hp, Wp, Cin_g)
    x_g = x_g.astype(compute_dtype)

    kpack = kh * kw * cin_g
    w_g = weight_oihw.reshape(groups, cout_g, cin_g, kh, kw)
    w_g = jnp.transpose(w_g, (0, 3, 4, 2, 1))                 # (G, KH, KW, Cin_g, Cout_g)
    w_g = w_g.reshape(groups, kpack, cout_g)                  # contraction = (kh, kw, ci)
    w_g = jnp.pad(w_g, ((0, 0), (0, 0), (0, cout_g_pad - cout_g))).astype(compute_dtype)

    b_g = jnp.pad(bias.reshape(groups, cout_g), ((0, 0), (0, cout_g_pad - cout_g)))
    b_g = b_g.reshape(groups, 1, cout_g_pad).astype(jnp.float32)

    kernel = functools.partial(_conv_relu_kernel, kh_sz=kh, kw_sz=kw,
                               stride=stride, dilation=dilation)

    out = pl.pallas_call(
        kernel,
        out_shape=jax.ShapeDtypeStruct((n, groups, ho, wo, cout_g_pad), x_nchw.dtype),
        grid_spec=pltpu.PrefetchScalarGridSpec(
            num_scalar_prefetch=0,
            grid=(n, groups, n_co, n_ho),
            in_specs=[
                # Padded image of one (batch, group): index map is independent of the
                # co/ho axes, so it is DMA'd once per (b, g) and stays VMEM-resident.
                # TODO(synk): for very large H*W, switch this input to
                # memory_space=pl.ANY + manual halo-band make_async_copy so VMEM only
                # holds a row band instead of the whole image.
                pl.BlockSpec((1, 1, hp, wp, cin_g),
                             lambda b, g, co, hi: (b, g, 0, 0, 0)),
                # Filter tile: independent of b/hi -> fetched once per (g, co), never
                # re-DMA'd across the innermost spatial axis.
                pl.BlockSpec((1, kpack, tco),
                             lambda b, g, co, hi: (g, 0, co)),
                pl.BlockSpec((1, 1, tco),
                             lambda b, g, co, hi: (g, 0, co)),
            ],
            out_specs=pl.BlockSpec((1, 1, th, wo, tco),
                                   lambda b, g, co, hi: (b, g, hi, 0, co)),
        ),
        compiler_params=pltpu.CompilerParams(
            # No cross-iteration state anywhere -> every axis is parallel; lets
            # megacore split on the spatial axis too (useful for batch=1).
            dimension_semantics=("parallel", "parallel", "parallel", "parallel"),
            vmem_limit_bytes=64 * 1024 * 1024,
        ),
    )(x_g, w_g, b_g)

    out = out[..., :cout_g]                                   # drop Cout lane padding
    if groups == 1:
        out_nhwc = out[:, 0]
    else:
        out_nhwc = jnp.transpose(out, (0, 2, 3, 1, 4)).reshape(n, ho, wo, cout)
    return jnp.transpose(out_nhwc, (0, 3, 1, 2))              # back to NCHW


def _reference(x, w, b, stride, padding, dilation, groups):
    out = jax.lax.conv_general_dilated(
        x, w, window_strides=stride,
        padding=[(padding[0], padding[0]), (padding[1], padding[1])],
        rhs_dilation=dilation,
        dimension_numbers=("NCHW", "OIHW", "NCHW"),
        feature_group_count=groups)
    out = out + b.reshape(1, -1, 1, 1)
    return jnp.maximum(out, 0.0)


def _check(name, out, ref, atol, rtol):
    out = jnp.asarray(out, jnp.float32)
    ref = jnp.asarray(ref, jnp.float32)
    assert out.shape == ref.shape, (name, out.shape, ref.shape)
    err = float(jnp.max(jnp.abs(out - ref)))
    assert jnp.allclose(out, ref, atol=atol, rtol=rtol), (name, err)


if __name__ == "__main__":
    key = jax.random.PRNGKey(0)
    k_x, k_w, k_b, k_w2 = jax.random.split(key, 4)

    # small shapes consistent with the module's forward (NCHW conv input)
    N, Cin, H, W = 2, 4, 16, 16
    Cout, KH, KW = 8, 3, 3

    x = jax.random.normal(k_x, (N, Cin, H, W), jnp.float32)
    weight = jax.random.normal(k_w, (Cout, Cin, KH, KW), jnp.float32) * 0.1
    bias = jax.random.normal(k_b, (Cout,), jnp.float32) * 0.1

    cfg = dict(stride=(1, 1), padding=(1, 1), dilation=(1, 1), groups=1)

    # 1) f32 compute (matches PyTorch f32 semantics); tolerance covers MXU pass diffs.
    out = jax.block_until_ready(conv2d_relu(x, weight, bias, **cfg))
    _check("f32", out, _reference(x, weight, bias, **cfg), atol=1e-3, rtol=1e-3)

    # 2) bf16 MXU operands with f32 accumulation (the fast path on v6e/v7x).
    out_bf16 = jax.block_until_ready(
        conv2d_relu(x, weight, bias, **cfg, compute_dtype=jnp.bfloat16))
    _check("bf16", out_bf16, _reference(x, weight, bias, **cfg), atol=2e-2, rtol=2e-2)

    # 3) grouped conv (each group handled by its own grid axis / output slab).
    cfg_g = dict(stride=(1, 1), padding=(1, 1), dilation=(1, 1), groups=2)
    weight_g = jax.random.normal(k_w2, (Cout, Cin // 2, KH, KW), jnp.float32) * 0.1
    out_g = jax.block_until_ready(conv2d_relu(x, weight_g, bias, **cfg_g))
    _check("groups2", out_g, _reference(x, weight_g, bias, **cfg_g),
           atol=1e-3, rtol=1e-3)

    print("KERNEL_OK")
</pallas_src>

<mosaic_0001>
module attributes {stable_mosaic.version = 11 : i64} {
  func.func @_conv_relu_kernel(%arg0: i32, %arg1: i32, %arg2: i32, %arg3: i32, %arg4: memref<1x1x18x18x4xf32, #tpu.memory_space<vmem>>, %arg5: memref<1x36x128xf32, #tpu.memory_space<vmem>>, %arg6: memref<1x1x128xf32, #tpu.memory_space<vmem>>, %arg7: memref<1x1x16x16x128xf32, #tpu.memory_space<vmem>>) attributes {dimension_semantics = [#tpu.dimension_semantics<parallel>, #tpu.dimension_semantics<parallel>, #tpu.dimension_semantics<parallel>, #tpu.dimension_semantics<parallel>], iteration_bounds = array<i64: 2, 1, 1, 1>, scalar_prefetch = 0 : i64, scratch_operands = 0 : i64, tpu.core_type = #tpu.core_type<tc>, window_params = [{transform_indices = @transform_0, window_bounds = array<i64: 1, 1, 18, 18, 4>}, {transform_indices = @transform_1, window_bounds = array<i64: 1, 36, 128>}, {transform_indices = @transform_2, window_bounds = array<i64: 1, 1, 128>}, {transform_indices = @transform_3, window_bounds = array<i64: 1, 1, 16, 16, 128>}]} {
    %c16_i32 = arith.constant 16 : i32
    %0 = arith.muli %arg3, %c16_i32 : i32
    %1 = tpu.assume_multiple %0, 16 : i32
    %c0_i32 = arith.constant 0 : i32
    %2 = arith.addi %1, %c0_i32 : i32
    %c0 = arith.constant 0 : index
    %c0_0 = arith.constant 0 : index
    %3 = arith.index_cast %2 : i32 to index
    %c0_1 = arith.constant 0 : index
    %c0_2 = arith.constant 0 : index
    %4 = vector.load %arg4[%c0, %c0_0, %3, %c0_1, %c0_2] : memref<1x1x18x18x4xf32, #tpu.memory_space<vmem>>, vector<1x1x16x16x4xf32>
    %5 = vector.shape_cast %4 : vector<1x1x16x16x4xf32> to vector<16x16x4xf32>
    %c0_i32_3 = arith.constant 0 : i32
    %6 = arith.addi %1, %c0_i32_3 : i32
    %c0_4 = arith.constant 0 : index
    %c0_5 = arith.constant 0 : index
    %7 = arith.index_cast %6 : i32 to index
    %c1 = arith.constant 1 : index
    %c0_6 = arith.constant 0 : index
    %8 = vector.load %arg4[%c0_4, %c0_5, %7, %c1, %c0_6] : memref<1x1x18x18x4xf32, #tpu.memory_space<vmem>>, vector<1x1x16x16x4xf32>
    %9 = vector.shape_cast %8 : vector<1x1x16x16x4xf32> to vector<16x16x4xf32>
    %c0_i32_7 = arith.constant 0 : i32
    %10 = arith.addi %1, %c0_i32_7 : i32
    %c0_8 = arith.constant 0 : index
    %c0_9 = arith.constant 0 : index
    %11 = arith.index_cast %10 : i32 to index
    %c2 = arith.constant 2 : index
    %c0_10 = arith.constant 0 : index
    %12 = vector.load %arg4[%c0_8, %c0_9, %11, %c2, %c0_10] : memref<1x1x18x18x4xf32, #tpu.memory_space<vmem>>, vector<1x1x16x16x4xf32>
    %13 = vector.shape_cast %12 : vector<1x1x16x16x4xf32> to vector<16x16x4xf32>
    %c1_i32 = arith.constant 1 : i32
    %14 = arith.addi %1, %c1_i32 : i32
    %c0_11 = arith.constant 0 : index
    %c0_12 = arith.constant 0 : index
    %15 = arith.index_cast %14 : i32 to index
    %c0_13 = arith.constant 0 : index
    %c0_14 = arith.constant 0 : index
    %16 = vector.load %arg4[%c0_11, %c0_12, %15, %c0_13, %c0_14] : memref<1x1x18x18x4xf32, #tpu.memory_space<vmem>>, vector<1x1x16x16x4xf32>
    %17 = vector.shape_cast %16 : vector<1x1x16x16x4xf32> to vector<16x16x4xf32>
    %c1_i32_15 = arith.constant 1 : i32
    %18 = arith.addi %1, %c1_i32_15 : i32
    %c0_16 = arith.constant 0 : index
    %c0_17 = arith.constant 0 : index
    %19 = arith.index_cast %18 : i32 to index
    %c1_18 = arith.constant 1 : index
    %c0_19 = arith.constant 0 : index
    %20 = vector.load %arg4[%c0_16, %c0_17, %19, %c1_18, %c0_19] : memref<1x1x18x18x4xf32, #tpu.memory_space<vmem>>, vector<1x1x16x16x4xf32>
    %21 = vector.shape_cast %20 : vector<1x1x16x16x4xf32> to vector<16x16x4xf32>
    %c1_i32_20 = arith.constant 1 : i32
    %22 = arith.addi %1, %c1_i32_20 : i32
    %c0_21 = arith.constant 0 : index
    %c0_22 = arith.constant 0 : index
    %23 = arith.index_cast %22 : i32 to index
    %c2_23 = arith.constant 2 : index
    %c0_24 = arith.constant 0 : index
    %24 = vector.load %arg4[%c0_21, %c0_22, %23, %c2_23, %c0_24] : memref<1x1x18x18x4xf32, #tpu.memory_space<vmem>>, vector<1x1x16x16x4xf32>
    %25 = vector.shape_cast %24 : vector<1x1x16x16x4xf32> to vector<16x16x4xf32>
    %c2_i32 = arith.constant 2 : i32
    %26 = arith.addi %1, %c2_i32 : i32
    %c0_25 = arith.constant 0 : index
    %c0_26 = arith.constant 0 : index
    %27 = arith.index_cast %26 : i32 to index
    %c0_27 = arith.constant 0 : index
    %c0_28 = arith.constant 0 : index
    %28 = vector.load %arg4[%c0_25, %c0_26, %27, %c0_27, %c0_28] : memref<1x1x18x18x4xf32, #tpu.memory_space<vmem>>, vector<1x1x16x16x4xf32>
    %29 = vector.shape_cast %28 : vector<1x1x16x16x4xf32> to vector<16x16x4xf32>
    %c2_i32_29 = arith.constant 2 : i32
    %30 = arith.addi %1, %c2_i32_29 : i32
    %c0_30 = arith.constant 0 : index
    %c0_31 = arith.constant 0 : index
    %31 = arith.index_cast %30 : i32 to index
    %c1_32 = arith.constant 1 : index
    %c0_33 = arith.constant 0 : index
    %32 = vector.load %arg4[%c0_30, %c0_31, %31, %c1_32, %c0_33] : memref<1x1x18x18x4xf32, #tpu.memory_space<vmem>>, vector<1x1x16x16x4xf32>
    %33 = vector.shape_cast %32 : vector<1x1x16x16x4xf32> to vector<16x16x4xf32>
    %c2_i32_34 = arith.constant 2 : i32
    %34 = arith.addi %1, %c2_i32_34 : i32
    %c0_35 = arith.constant 0 : index
    %c0_36 = arith.constant 0 : index
    %35 = arith.index_cast %34 : i32 to index
    %c2_37 = arith.constant 2 : index
    %c0_38 = arith.constant 0 : index
    %36 = vector.load %arg4[%c0_35, %c0_36, %35, %c2_37, %c0_38] : memref<1x1x18x18x4xf32, #tpu.memory_space<vmem>>, vector<1x1x16x16x4xf32>
    %37 = vector.shape_cast %36 : vector<1x1x16x16x4xf32> to vector<16x16x4xf32>
    %38 = tpu.concatenate %5, %9, %13, %17, %21, %25, %29, %33, %37 in 2 : vector<16x16x4xf32>, vector<16x16x4xf32>, vector<16x16x4xf32>, vector<16x16x4xf32>, vector<16x16x4xf32>, vector<16x16x4xf32>, vector<16x16x4xf32>, vector<16x16x4xf32>, vector<16x16x4xf32> -> vector<16x16x36xf32>
    %39 = vector.shape_cast %38 : vector<16x16x36xf32> to vector<256x36xf32>
    %c0_39 = arith.constant 0 : index
    %c0_40 = arith.constant 0 : index
    %c0_41 = arith.constant 0 : index
    %40 = vector.load %arg5[%c0_39, %c0_40, %c0_41] : memref<1x36x128xf32, #tpu.memory_space<vmem>>, vector<1x36x128xf32>
    %41 = vector.shape_cast %40 : vector<1x36x128xf32> to vector<36x128xf32>
    %cst = arith.constant dense<0.000000e+00> : vector<256x128xf32>
    %42 = tpu.matmul %39, %41, %cst {dimension_numbers = #tpu.dot_dimension_numbers<[1], [0], [0], [1], [0, 0, 1, 1], [], []>} : vector<256x36xf32>, vector<36x128xf32>, vector<256x128xf32> -> vector<256x128xf32>
    %c0_42 = arith.constant 0 : index
    %c0_43 = arith.constant 0 : index
    %c0_44 = arith.constant 0 : index
    %43 = vector.load %arg6[%c0_42, %c0_43, %c0_44] : memref<1x1x128xf32, #tpu.memory_space<vmem>>, vector<1x1x128xf32>
    %44 = vector.shape_cast %43 : vector<1x1x128xf32> to vector<1x128xf32>
    %45 = vector.broadcast %44 : vector<1x128xf32> to vector<256x128xf32>
    %46 = arith.addf %42, %45 : vector<256x128xf32>
    %cst_45 = arith.constant 0.000000e+00 : f32
    %47 = vector.broadcast %cst_45 : f32 to vector<256x128xf32>
    %48 = arith.maximumf %46, %47 : vector<256x128xf32>
    %49 = vector.shape_cast %48 : vector<256x128xf32> to vector<1x1x16x16x128xf32>
    %c0_46 = arith.constant 0 : index
    %c0_47 = arith.constant 0 : index
    %c0_48 = arith.constant 0 : index
    %c0_49 = arith.constant 0 : index
    %c0_50 = arith.constant 0 : index
    %50 = vector.load %arg7[%c0_46, %c0_47, %c0_48, %c0_49, %c0_50] : memref<1x1x16x16x128xf32, #tpu.memory_space<vmem>>, vector<1x1x16x16x128xf32>
    tpu.vector_store %arg7[%c0_46, %c0_47, %c0_48, %c0_49, %c0_50], %49 {strides = array<i32>} : memref<1x1x16x16x128xf32, #tpu.memory_space<vmem>>, vector<1x1x16x16x128xf32>,
    return
  }
  func.func @transform_0(%arg0: i32, %arg1: i32, %arg2: i32, %arg3: i32) -> (i32, i32, i32, i32, i32) {
    %c0_i32 = arith.constant 0 : i32
    %c0_i32_0 = arith.constant 0 : i32
    %c0_i32_1 = arith.constant 0 : i32
    %c0_i32_2 = arith.constant 0 : i32
    return %arg0, %arg1, %c0_i32, %c0_i32_0, %c0_i32_1 : i32, i32, i32, i32, i32
  }
  func.func @transform_1(%arg0: i32, %arg1: i32, %arg2: i32, %arg3: i32) -> (i32, i32, i32) {
    %c0_i32 = arith.constant 0 : i32
    %c0_i32_0 = arith.constant 0 : i32
    return %arg1, %c0_i32, %arg2 : i32, i32, i32
  }
  func.func @transform_2(%arg0: i32, %arg1: i32, %arg2: i32, %arg3: i32) -> (i32, i32, i32) {
    %c0_i32 = arith.constant 0 : i32
    %c0_i32_0 = arith.constant 0 : i32
    return %arg1, %c0_i32, %arg2 : i32, i32, i32
  }
  func.func @transform_3(%arg0: i32, %arg1: i32, %arg2: i32, %arg3: i32) -> (i32, i32, i32, i32, i32) {
    %c0_i32 = arith.constant 0 : i32
    %c0_i32_0 = arith.constant 0 : i32
    return %arg0, %arg1, %arg3, %c0_i32, %arg2 : i32, i32, i32, i32, i32
  }
}

</mosaic_0001>

<llo_original>
// kernel: tpu_custom_call.1
$region0: #{tpu_custom_call.1}
  #allocation0 [shape = 'u32[]', space=smem, size = 0x4, offset = 0x4, fixed_abs, tag = 'smem constant byte address 0x4 - core index']
  #allocation1 [shape = 'u32[144,128]{1,0:T(1,128)}', space=vmem, size = 0x12000, scoped, tag = 'internal scratch']
  %s0 = inlined_call_operand.hbm [shape: f32[2,1,18,18,4], index: 0, kind: input, shape index: {}]
  %s1 = inlined_call_operand.hbm [shape: f32[1,36,128], index: 1, kind: input, shape index: {}]
  %s2 = inlined_call_operand.hbm [shape: f32[1,1,128], index: 2, kind: input, shape index: {}]
  %s3 = inlined_call_operand.hbm [shape: f32[2,1,16,16,128], index: 3, kind: output, shape index: {}]
  %s4 = sld [smem:[#allocation0]]
  $region57: #{tpu_custom_call.1} parent=0
    _
  %s6 = ssub.s32 1, %s4
  %s7 = scalar_select 0, %s6, %s4
  $region1: #{tpu_custom_call.1} parent=0
    #allocation2 [shape = 'u8[442368]{0}', space=vmem, size = 0x6c000, scoped, tag = 'input window, operand 0']
    #allocation3 [shape = 's32[2]{0}', space=sflag, size = 0x8, scoped, tag = 'scoped memory for tpu_custom_call.1']
    #allocation4 [shape = 's32[2]{0}', space=sflag, size = 0x8, scoped, tag = 'scoped memory for tpu_custom_call.1']
    #allocation5 [shape = 'u8[20480]{0}', space=vmem, size = 0x5000, scoped, tag = 'input window, operand 1, single buffered']
    #allocation6 [shape = 's32[1]{0}', space=sflag, size = 0x4, scoped, tag = 'scoped memory for tpu_custom_call.1']
    #allocation7 [shape = 'u8[512]{0}', space=vmem, size = 0x400, scoped, tag = 'input window, operand 2, single buffered']
    #allocation8 [shape = 'u8[262144]{0}', space=vmem, size = 0x40000, scoped, tag = 'output window, operand 0']
    %8 = vsyncpa [#allocation3], 0
    %s9 = scalar_lea.sflag [#allocation3], 1
    %10 = vsyncpa %s9, 0
    %11 = vsyncpa [#allocation6], 0
    %12 = vsyncpa [#allocation4], 0
    %s13 = scalar_lea.sflag [#allocation4], 1
    %14 = vsyncpa %s13, 0
    loop: start=0, step=1, limit=4
    $region2: #{tpu_custom_call.1} parent=1 // loop_pre_header
      _
    $region3: #{tpu_custom_call.1} parent=1 // loop_header
      %s16 = sphi 0, %s20
      %p17 = scmp.ge.s32.totalorder %s16, 4
      %s23 = sphi 0, %s49
      %s24 = sphi 0, %s45
      %s25 = sphi 0, %s41
      %s26 = sphi 0, %s37
      %s27 = sphi 0, %s23
      %s28 = sphi 0, %s24
      %s29 = sphi 0, %s25
      %s30 = sphi 0, %s26
      %s31 = sphi 0, %s27
      %s32 = sphi 0, %s28
      %s33 = sphi 0, %s29
      %s34 = sphi 0, %s30
      %s54 = sphi 0, %s56
      %s57 = sphi 0, %s54
      %s58 = sphi 0, %s57
      %s74 = sphi 0, %s58
      %s82 = sphi 0, %s84
      %s85 = sphi 0, %s82
      %s86 = sphi 0, %s85
      %s102 = sphi 0, %s86
      %s110 = sphi 0, %s112
      %s113 = sphi 0, %s110
      %s114 = sphi 0, %s113
      %s130 = sphi 0, %s114
      %s142 = sphi 0, %s144
      %s145 = sphi 0, %s142
      %s146 = sphi 0, %s145
      %s162 = sphi 0, %s146
    $region4: #{tpu_custom_call.1} parent=1 // loop_header_branch
      %19 = sbr.rel (%p17) target = $region8
    $region5: #{tpu_custom_call.1} parent=1 // loop_body
      %s21 = ssub.s32 %s16, 1
      %s22 = ssub.s32 %s16, 2
      %s35 = sadd.s32 1, %s26
      %p36 = scmp.ge.s32.totalorder %s35, 1
      %s37 = scalar_select %p36, 0, %s35
      %s38 = sadd.s32 1, %s25
      %s39 = scalar_select %p36, %s38, %s25
      %p40 = scmp.ge.s32.totalorder %s39, 1
      %s41 = scalar_select %p40, 0, %s39
      %s42 = sadd.s32 1, %s24
      %s43 = scalar_select %p40, %s42, %s24
      %p44 = scmp.ge.s32.totalorder %s43, 1
      %s45 = scalar_select %p44, 0, %s43
      %s46 = sadd.s32 1, %s23
      %s47 = scalar_select %p44, %s46, %s23
      %p48 = scmp.ge.s32.totalorder %s47, 2
      %s49 = scalar_select %p48, 0, %s47
      %s50 = ssub.s32 %s23, %s49
      %s51 = ssub.s32 %s24, %s45
      %s52 = sor.u32 %s50, %s51
      %p53 = scmp.eq.s32.totalorder %s52, 0
      %s55 = sadd.s32 %s54, 1
      %s56 = scalar_select %p53, %s54, %s55
      %p59 = pneg %p53
      %p60 = scmp.eq.s32.totalorder %s16, 1
      %p61 = por %p59, %p60
      %p62 = scmp.ne.s32.totalorder %s54, %s57
      %p63 = scmp.eq.s32.totalorder %s16, 0
      %p64 = por %p62, %p63
      %p65 = scmp.ne.s32.totalorder %s54, %s57
      %p66 = scmp.eq.s32.totalorder %s21, 1
      %p67 = por %p65, %p66
      %p68 = scmp.ne.s32.totalorder %s57, %s58
      %p69 = scmp.eq.s32.totalorder %s21, 0
      %p70 = por %p68, %p69
      %p71 = scmp.ne.s32.totalorder %s57, %s58
      %p72 = scmp.eq.s32.totalorder %s22, 1
      %p73 = por %p71, %p72
      %p75 = scmp.ne.s32.totalorder %s58, %s74
      %p76 = scmp.eq.s32.totalorder %s22, 0
      %p77 = por %p75, %p76
      %s78 = ssub.s32 %s24, %s45
      %s79 = ssub.s32 %s25, %s41
      %s80 = sor.u32 %s78, %s79
      %p81 = scmp.eq.s32.totalorder %s80, 0
      %s83 = sadd.s32 %s82, 1
      %s84 = scalar_select %p81, %s82, %s83
      %p87 = pneg %p81
      %p88 = scmp.eq.s32.totalorder %s16, 1
      %p89 = por %p87, %p88
      %p90 = scmp.ne.s32.totalorder %s82, %s85
      %p91 = scmp.eq.s32.totalorder %s16, 0
      %p92 = por %p90, %p91
      %p93 = scmp.ne.s32.totalorder %s82, %s85
      %p94 = scmp.eq.s32.totalorder %s21, 1
      %p95 = por %p93, %p94
      %p96 = scmp.ne.s32.totalorder %s85, %s86
      %p97 = scmp.eq.s32.totalorder %s21, 0
      %p98 = por %p96, %p97
      %p99 = scmp.ne.s32.totalorder %s85, %s86
      %p100 = scmp.eq.s32.totalorder %s22, 1
      %p101 = por %p99, %p100
      %p103 = scmp.ne.s32.totalorder %s86, %s102
      %p104 = scmp.eq.s32.totalorder %s22, 0
      %p105 = por %p103, %p104
      %s106 = ssub.s32 %s24, %s45
      %s107 = ssub.s32 %s25, %s41
      %s108 = sor.u32 %s106, %s107
      %p109 = scmp.eq.s32.totalorder %s108, 0
      %s111 = sadd.s32 %s110, 1
      %s112 = scalar_select %p109, %s110, %s111
      %p115 = pneg %p109
      %p116 = scmp.eq.s32.totalorder %s16, 1
      %p117 = por %p115, %p116
      %p118 = scmp.ne.s32.totalorder %s110, %s113
      %p119 = scmp.eq.s32.totalorder %s16, 0
      %p120 = por %p118, %p119
      %p121 = scmp.ne.s32.totalorder %s110, %s113
      %p122 = scmp.eq.s32.totalorder %s21, 1
      %p123 = por %p121, %p122
      %p124 = scmp.ne.s32.totalorder %s113, %s114
      %p125 = scmp.eq.s32.totalorder %s21, 0
      %p126 = por %p124, %p125
      %p127 = scmp.ne.s32.totalorder %s113, %s114
      %p128 = scmp.eq.s32.totalorder %s22, 1
      %p129 = por %p127, %p128
      %p131 = scmp.ne.s32.totalorder %s114, %s130
      %p132 = scmp.eq.s32.totalorder %s22, 0
      %p133 = por %p131, %p132
      %s134 = ssub.s32 %s23, %s49
      %s135 = ssub.s32 %s24, %s45
      %s136 = sor.u32 %s134, %s135
      %s137 = ssub.s32 %s26, %s37
      %s138 = sor.u32 %s136, %s137
      %s139 = ssub.s32 %s25, %s41
      %s140 = sor.u32 %s138, %s139
      %p141 = scmp.eq.s32.totalorder %s140, 0
      %s143 = sadd.s32 %s142, 1
      %s144 = scalar_select %p141, %s142, %s143
      %p147 = pneg %p141
      %p148 = scmp.eq.s32.totalorder %s16, 1
      %p149 = por %p147, %p148
      %p150 = scmp.ne.s32.totalorder %s142, %s145
      %p151 = scmp.eq.s32.totalorder %s16, 0
      %p152 = por %p150, %p151
      %p153 = scmp.ne.s32.totalorder %s142, %s145
      %p154 = scmp.eq.s32.totalorder %s21, 1
      %p155 = por %p153, %p154
      %p156 = scmp.ne.s32.totalorder %s145, %s146
      %p157 = scmp.eq.s32.totalorder %s21, 0
      %p158 = por %p156, %p157
      %p159 = scmp.ne.s32.totalorder %s145, %s146
      %p160 = scmp.eq.s32.totalorder %s22, 1
      %p161 = por %p159, %p160
      %p163 = scmp.ne.s32.totalorder %s146, %s162
      %p164 = scmp.eq.s32.totalorder %s22, 0
      %p165 = por %p163, %p164
      %p166 = scmp.le.s32.totalorder 1, %s16
      %p167 = scmp.lt.s32.totalorder %s16, 3
      %p168 = pnand %p166, %p167
      %p169 = pneg %p168
      // Predicated region
      $region9: #{tpu_custom_call.1} parent=5 // pred_check
        _
      $region10: #{tpu_custom_call.1} parent=5 // pred_check_branch
        %171 = sbr.rel (%p168) target = $region12
      $region11: #{tpu_custom_call.1} parent=5 // pred_region
        %s172 = ssub.s32 %s16, 1
        // Predicated region
        $region13: #{tpu_custom_call.1} parent=11 // pred_check
          %p173 = pneg %p98
        $region14: #{tpu_custom_call.1} parent=11 // pred_check_branch
          %175 = sbr.rel (%p173) target = $region16
        $region15: #{tpu_custom_call.1} parent=11 // pred_region
          %s177 = ssub.s32 640, 640
          %178 = vsyncadd [#allocation6], %s177
          %s179 = smul.addr %s28, 5
          %s180 = sadd.s32 %s29, %s179
          %s181 = smul.addr %s180, 128
          %s182 = scalar_lea.hbm %s1, %s181
          %s183 = sshll.u32 [#allocation5], 4
          %s184 = int_to_ptr.vmem [resolvable:$true] %s183
          %189 = dma.hbm_to_vmem [thread:$0]  %s182, 640, %s184, [#allocation6], 128, 128, 8
        $region16: #{tpu_custom_call.1} parent=11 // pred_fallthru
          _
        // Predicated region
        $region17: #{tpu_custom_call.1} parent=11 // pred_check
          %p190 = pneg %p126
        $region18: #{tpu_custom_call.1} parent=11 // pred_check_branch
          %192 = sbr.rel (%p190) target = $region20
        $region19: #{tpu_custom_call.1} parent=11 // pred_region
          %s194 = ssub.s32 16, 16
          %195 = vsyncadd [#allocation6], %s194
          %s196 = sadd.s32 %s29, %s28
          %s197 = smul.addr %s196, 16
          %s198 = scalar_lea.hbm %s2, %s197
          %s200 = sshll.u32 [#allocation7], 4
          %s201 = int_to_ptr.vmem [resolvable:$true] %s200
          %203 = dma.hbm_to_vmem [thread:$0]  %s198, 16, %s201, [#allocation6]
        $region20: #{tpu_custom_call.1} parent=11 // pred_fallthru
          _
      $region12: #{tpu_custom_call.1} parent=5 // pred_fallthru
        _
      %p204 = scmp.lt.s32.totalorder %s16, 2
      // Predicated region
      $region21: #{tpu_custom_call.1} parent=5 // pred_check
        %p205 = pneg %p204
      $region22: #{tpu_custom_call.1} parent=5 // pred_check_branch
        %207 = sbr.rel (%p205) target = $region24
      $region23: #{tpu_custom_call.1} parent=5 // pred_region
        // Predicated region
        $region25: #{tpu_custom_call.1} parent=23 // pred_check
          %p208 = pneg %p64
        $region26: #{tpu_custom_call.1} parent=23 // pred_check_branch
          %210 = sbr.rel (%p208) target = $region28
        $region27: #{tpu_custom_call.1} parent=23 // pred_region
          %s211 = sand.u32 %s54, 1
          %s212 = scalar_lea.sflag [#allocation3], %s211
          %s213 = sand.u32 %s54, 1
          %s214 = smul.addr %s213, 432
          %s215 = scalar_lea.vmem [#allocation2], %s214
          %s217 = ssub.s32 6912, 6912
          %218 = vsyncadd %s212, %s217
          %s219 = smul.addr %s24, 54
          %s220 = smul.addr %s23, 54
          %s221 = sadd.s32 %s219, %s220
          %s222 = smul.addr %s221, 128
          %s223 = scalar_lea.hbm %s0, %s222
          %s224 = sshll.u32 %s215, 4
          %s225 = int_to_ptr.vmem [resolvable:$true] %s224
          %230 = dma.hbm_to_vmem [thread:$0]  %s223, 6912, %s225, %s212, 128, 128, 8
        $region28: #{tpu_custom_call.1} parent=23 // pred_fallthru
          _
      $region24: #{tpu_custom_call.1} parent=5 // pred_fallthru
        _
      %p231 = scmp.le.s32.totalorder 1, %s16
      %p232 = scmp.lt.s32.totalorder %s16, 3
      %p233 = pnand %p231, %p232
      %p234 = pneg %p233
      // Predicated region
      $region29: #{tpu_custom_call.1} parent=5 // pred_check
        _
      $region30: #{tpu_custom_call.1} parent=5 // pred_check_branch
        %236 = sbr.rel (%p233) target = $region32
      $region31: #{tpu_custom_call.1} parent=5 // pred_region
        %s237 = ssub.s32 %s16, 1
        %s238 = sand.u32 %s57, 1
        %s239 = scalar_lea.sflag [#allocation3], %s238
        %s240 = sand.u32 %s57, 1
        %s241 = smul.addr %s240, 432
        %s242 = scalar_lea.vmem [#allocation2], %s241
        // Predicated region
        $region33: #{tpu_custom_call.1} parent=31 // pred_check
          %p243 = pneg %p70
        $region34: #{tpu_custom_call.1} parent=31 // pred_check_branch
          %245 = sbr.rel (%p243) target = $region36
        $region35: #{tpu_custom_call.1} parent=31 // pred_region
          %246 = dma.done %s239, 6912
        $region36: #{tpu_custom_call.1} parent=31 // pred_fallthru
          _
        // Predicated region
        $region37: #{tpu_custom_call.1} parent=31 // pred_check
          %p247 = pneg %p98
        $region38: #{tpu_custom_call.1} parent=31 // pred_check_branch
          %249 = sbr.rel (%p247) target = $region40
        $region39: #{tpu_custom_call.1} parent=31 // pred_region
          %250 = dma.done [#allocation6], 640
        $region40: #{tpu_custom_call.1} parent=31 // pred_fallthru
          _
        // Predicated region
        $region41: #{tpu_custom_call.1} parent=31 // pred_check
          %p251 = pneg %p126
        $region42: #{tpu_custom_call.1} parent=31 // pred_check_branch
          %253 = sbr.rel (%p251) target = $region44
        $region43: #{tpu_custom_call.1} parent=31 // pred_region
          %254 = dma.done [#allocation6], 16
        $region44: #{tpu_custom_call.1} parent=31 // pred_fallthru
          _
        %s255 = sand.u32 %s57, 1
        %s256 = scalar_lea.sflag [#allocation3], %s255
        %s257 = sand.u32 %s57, 1
        %s258 = smul.addr %s257, 432
        %s259 = scalar_lea.vmem [#allocation2], %s258
        %p260 = pneg %p70
        %p261 = pneg %p67
        %p262 = pneg %p98
        %p263 = pneg %p95
        %p264 = pneg %p126
        %p265 = pneg %p123
        %p266 = pneg %p158
        %p267 = pneg %p155
        %s268 = sand.u32 %s145, 1
        %s269 = scalar_lea.sflag [#allocation4], %s268
        %s270 = sand.u32 %s145, 1
        %s271 = smul.addr %s270, 256
        %s272 = scalar_lea.vmem [#allocation8], %s271
        %s273 = smul.u32 16, %s30
        %s274 = smul.u32 %s30, 16
        %s275 = smul.u32 %s274, 24
        %s276 = scalar_lea.vmem %s242, %s275 [#allocation2]
        %v277 = vld [vmem:[%s276] sm:$0xff]
        %v278 = vld [vmem:[%s276 + $0x8] sm:$0xff]
        %v279 = vld [vmem:[%s276 + $0x18] sm:$0xff]
        %v280 = vld [vmem:[%s276 + $0x20] sm:$0xff]
        %v281 = vld [vmem:[%s276 + $0x30] sm:$0xff]
        %v282 = vld [vmem:[%s276 + $0x38] sm:$0xff]
        %v283 = vld [vmem:[%s276 + $0x48] sm:$0xff]
        %v284 = vld [vmem:[%s276 + $0x50] sm:$0xff]
        %v285 = vld [vmem:[%s276 + $0x60] sm:$0xff]
        %v286 = vld [vmem:[%s276 + $0x68] sm:$0xff]
        %v287 = vld [vmem:[%s276 + $0x78] sm:$0xff]
        %v288 = vld [vmem:[%s276 + $0x80] sm:$0xff]
        %v289 = vld [vmem:[%s276 + $0x90] sm:$0xff]
        %v290 = vld [vmem:[%s276 + $0x98] sm:$0xff]
        %v291 = vld [vmem:[%s276 + $0xa8] sm:$0xff]
        %v292 = vld [vmem:[%s276 + $0xb0] sm:$0xff]
        %v293 = vld [vmem:[%s276 + $0xc0] sm:$0xff]
        %v294 = vld [vmem:[%s276 + $0xc8] sm:$0xff]
        %v295 = vld [vmem:[%s276 + $0xd8] sm:$0xff]
        %v296 = vld [vmem:[%s276 + $0xe0] sm:$0xff]
        %v297 = vld [vmem:[%s276 + $0xf0] sm:$0xff]
        %v298 = vld [vmem:[%s276 + $0xf8] sm:$0xff]
        %v299 = vld [vmem:[%s276 + $0x108] sm:$0xff]
        %v300 = vld [vmem:[%s276 + $0x110] sm:$0xff]
        %v301 = vld [vmem:[%s276 + $0x120] sm:$0xff]
        %v302 = vld [vmem:[%s276 + $0x128] sm:$0xff]
        %v303 = vld [vmem:[%s276 + $0x138] sm:$0xff]
        %v304 = vld [vmem:[%s276 + $0x140] sm:$0xff]
        %v305 = vld [vmem:[%s276 + $0x150] sm:$0xff]
        %v306 = vld [vmem:[%s276 + $0x158] sm:$0xff]
        %v307 = vld [vmem:[%s276 + $0x168] sm:$0xff]
        %v308 = vld [vmem:[%s276 + $0x170] sm:$0xff]
        %v309 = vld [vmem:[%s276 + $0x1] sm:$0xff]
        %v310 = vld [vmem:[%s276 + $0x9] sm:$0xff]
        %v311 = vld [vmem:[%s276 + $0x19] sm:$0xff]
        %v312 = vld [vmem:[%s276 + $0x21] sm:$0xff]
        %v313 = vld [vmem:[%s276 + $0x31] sm:$0xff]
        %v314 = vld [vmem:[%s276 + $0x39] sm:$0xff]
        %v315 = vld [vmem:[%s276 + $0x49] sm:$0xff]
        %v316 = vld [vmem:[%s276 + $0x51] sm:$0xff]
        %v317 = vld [vmem:[%s276 + $0x61] sm:$0xff]
        %v318 = vld [vmem:[%s276 + $0x69] sm:$0xff]
        %v319 = vld [vmem:[%s276 + $0x79] sm:$0xff]
        %v320 = vld [vmem:[%s276 + $0x81] sm:$0xff]
        %v321 = vld [vmem:[%s276 + $0x91] sm:$0xff]
        %v322 = vld [vmem:[%s276 + $0x99] sm:$0xff]
        %v323 = vld [vmem:[%s276 + $0xa9] sm:$0xff]
        %v324 = vld [vmem:[%s276 + $0xb1] sm:$0xff]
        %v325 = vld [vmem:[%s276 + $0xc1] sm:$0xff]
        %v326 = vld [vmem:[%s276 + $0xc9] sm:$0xff]
        %v327 = vld [vmem:[%s276 + $0xd9] sm:$0xff]
        %v328 = vld [vmem:[%s276 + $0xe1] sm:$0xff]
        %v329 = vld [vmem:[%s276 + $0xf1] sm:$0xff]
        %v330 = vld [vmem:[%s276 + $0xf9] sm:$0xff]
        %v331 = vld [vmem:[%s276 + $0x109] sm:$0xff]
        %v332 = vld [vmem:[%s276 + $0x111] sm:$0xff]
        %v333 = vld [vmem:[%s276 + $0x121] sm:$0xff]
        %v334 = vld [vmem:[%s276 + $0x129] sm:$0xff]
        %v335 = vld [vmem:[%s276 + $0x139] sm:$0xff]
        %v336 = vld [vmem:[%s276 + $0x141] sm:$0xff]
        %v337 = vld [vmem:[%s276 + $0x151] sm:$0xff]
        %v338 = vld [vmem:[%s276 + $0x159] sm:$0xff]
        %v339 = vld [vmem:[%s276 + $0x169] sm:$0xff]
        %v340 = vld [vmem:[%s276 + $0x171] sm:$0xff]
        %v341 = vld [vmem:[%s276 + $0x2] sm:$0xff]
        %v342 = vld [vmem:[%s276 + $0xa] sm:$0xff]
        %v343 = vld [vmem:[%s276 + $0x1a] sm:$0xff]
        %v344 = vld [vmem:[%s276 + $0x22] sm:$0xff]
        %v345 = vld [vmem:[%s276 + $0x32] sm:$0xff]
        %v346 = vld [vmem:[%s276 + $0x3a] sm:$0xff]
        %v347 = vld [vmem:[%s276 + $0x4a] sm:$0xff]
        %v348 = vld [vmem:[%s276 + $0x52] sm:$0xff]
        %v349 = vld [vmem:[%s276 + $0x62] sm:$0xff]
        %v350 = vld [vmem:[%s276 + $0x6a] sm:$0xff]
        %v351 = vld [vmem:[%s276 + $0x7a] sm:$0xff]
        %v352 = vld [vmem:[%s276 + $0x82] sm:$0xff]
        %v353 = vld [vmem:[%s276 + $0x92] sm:$0xff]
        %v354 = vld [vmem:[%s276 + $0x9a] sm:$0xff]
        %v355 = vld [vmem:[%s276 + $0xaa] sm:$0xff]
        %v356 = vld [vmem:[%s276 + $0xb2] sm:$0xff]
        %v357 = vld [vmem:[%s276 + $0xc2] sm:$0xff]
        %v358 = vld [vmem:[%s276 + $0xca] sm:$0xff]
        %v359 = vld [vmem:[%s276 + $0xda] sm:$0xff]
        %v360 = vld [vmem:[%s276 + $0xe2] sm:$0xff]
        %v361 = vld [vmem:[%s276 + $0xf2] sm:$0xff]
        %v362 = vld [vmem:[%s276 + $0xfa] sm:$0xff]
        %v363 = vld [vmem:[%s276 + $0x10a] sm:$0xff]
        %v364 = vld [vmem:[%s276 + $0x112] sm:$0xff]
        %v365 = vld [vmem:[%s276 + $0x122] sm:$0xff]
        %v366 = vld [vmem:[%s276 + $0x12a] sm:$0xff]
        %v367 = vld [vmem:[%s276 + $0x13a] sm:$0xff]
        %v368 = vld [vmem:[%s276 + $0x142] sm:$0xff]
        %v369 = vld [vmem:[%s276 + $0x152] sm:$0xff]
        %v370 = vld [vmem:[%s276 + $0x15a] sm:$0xff]
        %v371 = vld [vmem:[%s276 + $0x16a] sm:$0xff]
        %v372 = vld [vmem:[%s276 + $0x172] sm:$0xff]
        %s373 = sadd.s32 %s274, 1
        %s374 = smul.u32 %s373, 24
        %s375 = scalar_lea.vmem %s242, %s374 [#allocation2]
        %v376 = vld [vmem:[%s375] sm:$0xff]
        %v377 = vld [vmem:[%s375 + $0x8] sm:$0xff]
        %v378 = vld [vmem:[%s375 + $0x18] sm:$0xff]
        %v379 = vld [vmem:[%s375 + $0x20] sm:$0xff]
        %v380 = vld [vmem:[%s375 + $0x30] sm:$0xff]
        %v381 = vld [vmem:[%s375 + $0x38] sm:$0xff]
        %v382 = vld [vmem:[%s375 + $0x48] sm:$0xff]
        %v383 = vld [vmem:[%s375 + $0x50] sm:$0xff]
        %v384 = vld [vmem:[%s375 + $0x60] sm:$0xff]
        %v385 = vld [vmem:[%s375 + $0x68] sm:$0xff]
        %v386 = vld [vmem:[%s375 + $0x78] sm:$0xff]
        %v387 = vld [vmem:[%s375 + $0x80] sm:$0xff]
        %v388 = vld [vmem:[%s375 + $0x90] sm:$0xff]
        %v389 = vld [vmem:[%s375 + $0x98] sm:$0xff]
        %v390 = vld [vmem:[%s375 + $0xa8] sm:$0xff]
        %v391 = vld [vmem:[%s375 + $0xb0] sm:$0xff]
        %v392 = vld [vmem:[%s375 + $0xc0] sm:$0xff]
        %v393 = vld [vmem:[%s375 + $0xc8] sm:$0xff]
        %v394 = vld [vmem:[%s375 + $0xd8] sm:$0xff]
        %v395 = vld [vmem:[%s375 + $0xe0] sm:$0xff]
        %v396 = vld [vmem:[%s375 + $0xf0] sm:$0xff]
        %v397 = vld [vmem:[%s375 + $0xf8] sm:$0xff]
        %v398 = vld [vmem:[%s375 + $0x108] sm:$0xff]
        %v399 = vld [vmem:[%s375 + $0x110] sm:$0xff]
        %v400 = vld [vmem:[%s375 + $0x120] sm:$0xff]
        %v401 = vld [vmem:[%s375 + $0x128] sm:$0xff]
        %v402 = vld [vmem:[%s375 + $0x138] sm:$0xff]
        %v403 = vld [vmem:[%s375 + $0x140] sm:$0xff]
        %v404 = vld [vmem:[%s375 + $0x150] sm:$0xff]
        %v405 = vld [vmem:[%s375 + $0x158] sm:$0xff]
        %v406 = vld [vmem:[%s375 + $0x168] sm:$0xff]
        %v407 = vld [vmem:[%s375 + $0x170] sm:$0xff]
        %v408 = vld [vmem:[%s375 + $0x1] sm:$0xff]
        %v409 = vld [vmem:[%s375 + $0x9] sm:$0xff]
        %v410 = vld [vmem:[%s375 + $0x19] sm:$0xff]
        %v411 = vld [vmem:[%s375 + $0x21] sm:$0xff]
        %v412 = vld [vmem:[%s375 + $0x31] sm:$0xff]
        %v413 = vld [vmem:[%s375 + $0x39] sm:$0xff]
        %v414 = vld [vmem:[%s375 + $0x49] sm:$0xff]
        %v415 = vld [vmem:[%s375 + $0x51] sm:$0xff]
        %v416 = vld [vmem:[%s375 + $0x61] sm:$0xff]
        %v417 = vld [vmem:[%s375 + $0x69] sm:$0xff]
        %v418 = vld [vmem:[%s375 + $0x79] sm:$0xff]
        %v419 = vld [vmem:[%s375 + $0x81] sm:$0xff]
        %v420 = vld [vmem:[%s375 + $0x91] sm:$0xff]
        %v421 = vld [vmem:[%s375 + $0x99] sm:$0xff]
        %v422 = vld [vmem:[%s375 + $0xa9] sm:$0xff]
        %v423 = vld [vmem:[%s375 + $0xb1] sm:$0xff]
        %v424 = vld [vmem:[%s375 + $0xc1] sm:$0xff]
        %v425 = vld [vmem:[%s375 + $0xc9] sm:$0xff]
        %v426 = vld [vmem:[%s375 + $0xd9] sm:$0xff]
        %v427 = vld [vmem:[%s375 + $0xe1] sm:$0xff]
        %v428 = vld [vmem:[%s375 + $0xf1] sm:$0xff]
        %v429 = vld [vmem:[%s375 + $0xf9] sm:$0xff]
        %v430 = vld [vmem:[%s375 + $0x109] sm:$0xff]
        %v431 = vld [vmem:[%s375 + $0x111] sm:$0xff]
        %v432 = vld [vmem:[%s375 + $0x121] sm:$0xff]
        %v433 = vld [vmem:[%s375 + $0x129] sm:$0xff]
        %v434 = vld [vmem:[%s375 + $0x139] sm:$0xff]
        %v435 = vld [vmem:[%s375 + $0x141] sm:$0xff]
        %v436 = vld [vmem:[%s375 + $0x151] sm:$0xff]
        %v437 = vld [vmem:[%s375 + $0x159] sm:$0xff]
        %v438 = vld [vmem:[%s375 + $0x169] sm:$0xff]
        %v439 = vld [vmem:[%s375 + $0x171] sm:$0xff]
        %v440 = vld [vmem:[%s375 + $0x2] sm:$0xff]
        %v441 = vld [vmem:[%s375 + $0xa] sm:$0xff]
        %v442 = vld [vmem:[%s375 + $0x1a] sm:$0xff]
        %v443 = vld [vmem:[%s375 + $0x22] sm:$0xff]
        %v444 = vld [vmem:[%s375 + $0x32] sm:$0xff]
        %v445 = vld [vmem:[%s375 + $0x3a] sm:$0xff]
        %v446 = vld [vmem:[%s375 + $0x4a] sm:$0xff]
        %v447 = vld [vmem:[%s375 + $0x52] sm:$0xff]
        %v448 = vld [vmem:[%s375 + $0x62] sm:$0xff]
        %v449 = vld [vmem:[%s375 + $0x6a] sm:$0xff]
        %v450 = vld [vmem:[%s375 + $0x7a] sm:$0xff]
        %v451 = vld [vmem:[%s375 + $0x82] sm:$0xff]
        %v452 = vld [vmem:[%s375 + $0x92] sm:$0xff]
        %v453 = vld [vmem:[%s375 + $0x9a] sm:$0xff]
        %v454 = vld [vmem:[%s375 + $0xaa] sm:$0xff]
        %v455 = vld [vmem:[%s375 + $0xb2] sm:$0xff]
        %v456 = vld [vmem:[%s375 + $0xc2] sm:$0xff]
        %v457 = vld [vmem:[%s375 + $0xca] sm:$0xff]
        %v458 = vld [vmem:[%s375 + $0xda] sm:$0xff]
        %v459 = vld [vmem:[%s375 + $0xe2] sm:$0xff]
        %v460 = vld [vmem:[%s375 + $0xf2] sm:$0xff]
        %v461 = vld [vmem:[%s375 + $0xfa] sm:$0xff]
        %v462 = vld [vmem:[%s375 + $0x10a] sm:$0xff]
        %v463 = vld [vmem:[%s375 + $0x112] sm:$0xff]
        %v464 = vld [vmem:[%s375 + $0x122] sm:$0xff]
        %v465 = vld [vmem:[%s375 + $0x12a] sm:$0xff]
        %v466 = vld [vmem:[%s375 + $0x13a] sm:$0xff]
        %v467 = vld [vmem:[%s375 + $0x142] sm:$0xff]
        %v468 = vld [vmem:[%s375 + $0x152] sm:$0xff]
        %v469 = vld [vmem:[%s375 + $0x15a] sm:$0xff]
        %v470 = vld [vmem:[%s375 + $0x16a] sm:$0xff]
        %v471 = vld [vmem:[%s375 + $0x172] sm:$0xff]
        %s472 = sadd.s32 %s274, 2
        %s473 = smul.u32 %s472, 24
        %s474 = scalar_lea.vmem %s242, %s473 [#allocation2]
        %v475 = vld [vmem:[%s474] sm:$0xff]
        %v476 = vld [vmem:[%s474 + $0x8] sm:$0xff]
        %v477 = vld [vmem:[%s474 + $0x18] sm:$0xff]
        %v478 = vld [vmem:[%s474 + $0x20] sm:$0xff]
        %v479 = vld [vmem:[%s474 + $0x30] sm:$0xff]
        %v480 = vld [vmem:[%s474 + $0x38] sm:$0xff]
        %v481 = vld [vmem:[%s474 + $0x48] sm:$0xff]
        %v482 = vld [vmem:[%s474 + $0x50] sm:$0xff]
        %v483 = vld [vmem:[%s474 + $0x60] sm:$0xff]
        %v484 = vld [vmem:[%s474 + $0x68] sm:$0xff]
        %v485 = vld [vmem:[%s474 + $0x78] sm:$0xff]
        %v486 = vld [vmem:[%s474 + $0x80] sm:$0xff]
        %v487 = vld [vmem:[%s474 + $0x90] sm:$0xff]
        %v488 = vld [vmem:[%s474 + $0x98] sm:$0xff]
        %v489 = vld [vmem:[%s474 + $0xa8] sm:$0xff]
        %v490 = vld [vmem:[%s474 + $0xb0] sm:$0xff]
        %v491 = vld [vmem:[%s474 + $0xc0] sm:$0xff]
        %v492 = vld [vmem:[%s474 + $0xc8] sm:$0xff]
        %v493 = vld [vmem:[%s474 + $0xd8] sm:$0xff]
        %v494 = vld [vmem:[%s474 + $0xe0] sm:$0xff]
        %v495 = vld [vmem:[%s474 + $0xf0] sm:$0xff]
        %v496 = vld [vmem:[%s474 + $0xf8] sm:$0xff]
        %v497 = vld [vmem:[%s474 + $0x108] sm:$0xff]
        %v498 = vld [vmem:[%s474 + $0x110] sm:$0xff]
        %v499 = vld [vmem:[%s474 + $0x120] sm:$0xff]
        %v500 = vld [vmem:[%s474 + $0x128] sm:$0xff]
        %v501 = vld [vmem:[%s474 + $0x138] sm:$0xff]
        %v502 = vld [vmem:[%s474 + $0x140] sm:$0xff]
        %v503 = vld [vmem:[%s474 + $0x150] sm:$0xff]
        %v504 = vld [vmem:[%s474 + $0x158] sm:$0xff]
        %v505 = vld [vmem:[%s474 + $0x168] sm:$0xff]
        %v506 = vld [vmem:[%s474 + $0x170] sm:$0xff]
        %v507 = vld [vmem:[%s474 + $0x1] sm:$0xff]
        %v508 = vld [vmem:[%s474 + $0x9] sm:$0xff]
        %v509 = vld [vmem:[%s474 + $0x19] sm:$0xff]
        %v510 = vld [vmem:[%s474 + $0x21] sm:$0xff]
        %v511 = vld [vmem:[%s474 + $0x31] sm:$0xff]
        %v512 = vld [vmem:[%s474 + $0x39] sm:$0xff]
        %v513 = vld [vmem:[%s474 + $0x49] sm:$0xff]
        %v514 = vld [vmem:[%s474 + $0x51] sm:$0xff]
        %v515 = vld [vmem:[%s474 + $0x61] sm:$0xff]
        %v516 = vld [vmem:[%s474 + $0x69] sm:$0xff]
        %v517 = vld [vmem:[%s474 + $0x79] sm:$0xff]
        %v518 = vld [vmem:[%s474 + $0x81] sm:$0xff]
        %v519 = vld [vmem:[%s474 + $0x91] sm:$0xff]
        %v520 = vld [vmem:[%s474 + $0x99] sm:$0xff]
        %v521 = vld [vmem:[%s474 + $0xa9] sm:$0xff]
        %v522 = vld [vmem:[%s474 + $0xb1] sm:$0xff]
        %v523 = vld [vmem:[%s474 + $0xc1] sm:$0xff]
        %v524 = vld [vmem:[%s474 + $0xc9] sm:$0xff]
        %v525 = vld [vmem:[%s474 + $0xd9] sm:$0xff]
        %v526 = vld [vmem:[%s474 + $0xe1] sm:$0xff]
        %v527 = vld [vmem:[%s474 + $0xf1] sm:$0xff]
        %v528 = vld [vmem:[%s474 + $0xf9] sm:$0xff]
        %v529 = vld [vmem:[%s474 + $0x109] sm:$0xff]
        %v530 = vld [vmem:[%s474 + $0x111] sm:$0xff]
        %v531 = vld [vmem:[%s474 + $0x121] sm:$0xff]
        %v532 = vld [vmem:[%s474 + $0x129] sm:$0xff]
        %v533 = vld [vmem:[%s474 + $0x139] sm:$0xff]
        %v534 = vld [vmem:[%s474 + $0x141] sm:$0xff]
        %v535 = vld [vmem:[%s474 + $0x151] sm:$0xff]
        %v536 = vld [vmem:[%s474 + $0x159] sm:$0xff]
        %v537 = vld [vmem:[%s474 + $0x169] sm:$0xff]
        %v538 = vld [vmem:[%s474 + $0x171] sm:$0xff]
        %v539 = vld [vmem:[%s474 + $0x2] sm:$0xff]
        %v540 = vld [vmem:[%s474 + $0xa] sm:$0xff]
        %v541 = vld [vmem:[%s474 + $0x1a] sm:$0xff]
        %v542 = vld [vmem:[%s474 + $0x22] sm:$0xff]
        %v543 = vld [vmem:[%s474 + $0x32] sm:$0xff]
        %v544 = vld [vmem:[%s474 + $0x3a] sm:$0xff]
        %v545 = vld [vmem:[%s474 + $0x4a] sm:$0xff]
        %v546 = vld [vmem:[%s474 + $0x52] sm:$0xff]
        %v547 = vld [vmem:[%s474 + $0x62] sm:$0xff]
        %v548 = vld [vmem:[%s474 + $0x6a] sm:$0xff]
        %v549 = vld [vmem:[%s474 + $0x7a] sm:$0xff]
        %v550 = vld [vmem:[%s474 + $0x82] sm:$0xff]
        %v551 = vld [vmem:[%s474 + $0x92] sm:$0xff]
        %v552 = vld [vmem:[%s474 + $0x9a] sm:$0xff]
        %v553 = vld [vmem:[%s474 + $0xaa] sm:$0xff]
        %v554 = vld [vmem:[%s474 + $0xb2] sm:$0xff]
        %v555 = vld [vmem:[%s474 + $0xc2] sm:$0xff]
        %v556 = vld [vmem:[%s474 + $0xca] sm:$0xff]
        %v557 = vld [vmem:[%s474 + $0xda] sm:$0xff]
        %v558 = vld [vmem:[%s474 + $0xe2] sm:$0xff]
        %v559 = vld [vmem:[%s474 + $0xf2] sm:$0xff]
        %v560 = vld [vmem:[%s474 + $0xfa] sm:$0xff]
        %v561 = vld [vmem:[%s474 + $0x10a] sm:$0xff]
        %v562 = vld [vmem:[%s474 + $0x112] sm:$0xff]
        %v563 = vld [vmem:[%s474 + $0x122] sm:$0xff]
        %v564 = vld [vmem:[%s474 + $0x12a] sm:$0xff]
        %v565 = vld [vmem:[%s474 + $0x13a] sm:$0xff]
        %v566 = vld [vmem:[%s474 + $0x142] sm:$0xff]
        %v567 = vld [vmem:[%s474 + $0x152] sm:$0xff]
        %v568 = vld [vmem:[%s474 + $0x15a] sm:$0xff]
        %v569 = vld [vmem:[%s474 + $0x16a] sm:$0xff]
        %v570 = vld [vmem:[%s474 + $0x172] sm:$0xff]
        %603 = vrot.lane.b32.xlu0 %v309, 4
        %v604 = vpop.permute.xlu0 %603
        %605 = vrot.lane.b32.xlu0 %v310, 4
        %v606 = vpop.permute.xlu0 %605
        %607 = vrot.lane.b32.xlu0 %v311, 4
        %v608 = vpop.permute.xlu0 %607
        %609 = vrot.lane.b32.xlu0 %v312, 4
        %v610 = vpop.permute.xlu0 %609
        %611 = vrot.lane.b32.xlu0 %v313, 4
        %v612 = vpop.permute.xlu0 %611
        %613 = vrot.lane.b32.xlu0 %v314, 4
        %v614 = vpop.permute.xlu0 %613
        %615 = vrot.lane.b32.xlu0 %v315, 4
        %v616 = vpop.permute.xlu0 %615
        %617 = vrot.lane.b32.xlu0 %v316, 4
        %v618 = vpop.permute.xlu0 %617
        %619 = vrot.lane.b32.xlu0 %v317, 4
        %v620 = vpop.permute.xlu0 %619
        %621 = vrot.lane.b32.xlu0 %v318, 4
        %v622 = vpop.permute.xlu0 %621
        %623 = vrot.lane.b32.xlu0 %v319, 4
        %v624 = vpop.permute.xlu0 %623
        %625 = vrot.lane.b32.xlu0 %v320, 4
        %v626 = vpop.permute.xlu0 %625
        %627 = vrot.lane.b32.xlu0 %v321, 4
        %v628 = vpop.permute.xlu0 %627
        %629 = vrot.lane.b32.xlu0 %v322, 4
        %v630 = vpop.permute.xlu0 %629
        %631 = vrot.lane.b32.xlu0 %v323, 4
        %v632 = vpop.permute.xlu0 %631
        %633 = vrot.lane.b32.xlu0 %v324, 4
        %v634 = vpop.permute.xlu0 %633
        %635 = vrot.lane.b32.xlu0 %v325, 4
        %v636 = vpop.permute.xlu0 %635
        %637 = vrot.lane.b32.xlu0 %v326, 4
        %v638 = vpop.permute.xlu0 %637
        %639 = vrot.lane.b32.xlu0 %v327, 4
        %v640 = vpop.permute.xlu0 %639
        %641 = vrot.lane.b32.xlu0 %v328, 4
        %v642 = vpop.permute.xlu0 %641
        %643 = vrot.lane.b32.xlu0 %v329, 4
        %v644 = vpop.permute.xlu0 %643
        %645 = vrot.lane.b32.xlu0 %v330, 4
        %v646 = vpop.permute.xlu0 %645
        %647 = vrot.lane.b32.xlu0 %v331, 4
        %v648 = vpop.permute.xlu0 %647
        %649 = vrot.lane.b32.xlu0 %v332, 4
        %v650 = vpop.permute.xlu0 %649
        %651 = vrot.lane.b32.xlu0 %v333, 4
        %v652 = vpop.permute.xlu0 %651
        %653 = vrot.lane.b32.xlu0 %v334, 4
        %v654 = vpop.permute.xlu0 %653
        %655 = vrot.lane.b32.xlu0 %v335, 4
        %v656 = vpop.permute.xlu0 %655
        %657 = vrot.lane.b32.xlu0 %v336, 4
        %v658 = vpop.permute.xlu0 %657
        %659 = vrot.lane.b32.xlu0 %v337, 4
        %v660 = vpop.permute.xlu0 %659
        %661 = vrot.lane.b32.xlu0 %v338, 4
        %v662 = vpop.permute.xlu0 %661
        %663 = vrot.lane.b32.xlu0 %v339, 4
        %v664 = vpop.permute.xlu0 %663
        %665 = vrot.lane.b32.xlu0 %v340, 4
        %v666 = vpop.permute.xlu0 %665
        %731 = vrot.lane.b32.xlu0 %v341, 8
        %v732 = vpop.permute.xlu0 %731
        %733 = vrot.lane.b32.xlu0 %v342, 8
        %v734 = vpop.permute.xlu0 %733
        %735 = vrot.lane.b32.xlu0 %v343, 8
        %v736 = vpop.permute.xlu0 %735
        %737 = vrot.lane.b32.xlu0 %v344, 8
        %v738 = vpop.permute.xlu0 %737
        %739 = vrot.lane.b32.xlu0 %v345, 8
        %v740 = vpop.permute.xlu0 %739
        %741 = vrot.lane.b32.xlu0 %v346, 8
        %v742 = vpop.permute.xlu0 %741
        %743 = vrot.lane.b32.xlu0 %v347, 8
        %v744 = vpop.permute.xlu0 %743
        %745 = vrot.lane.b32.xlu0 %v348, 8
        %v746 = vpop.permute.xlu0 %745
        %747 = vrot.lane.b32.xlu0 %v349, 8
        %v748 = vpop.permute.xlu0 %747
        %749 = vrot.lane.b32.xlu0 %v350, 8
        %v750 = vpop.permute.xlu0 %749
        %751 = vrot.lane.b32.xlu0 %v351, 8
        %v752 = vpop.permute.xlu0 %751
        %753 = vrot.lane.b32.xlu0 %v352, 8
        %v754 = vpop.permute.xlu0 %753
        %755 = vrot.lane.b32.xlu0 %v353, 8
        %v756 = vpop.permute.xlu0 %755
        %757 = vrot.lane.b32.xlu0 %v354, 8
        %v758 = vpop.permute.xlu0 %757
        %759 = vrot.lane.b32.xlu0 %v355, 8
        %v760 = vpop.permute.xlu0 %759
        %761 = vrot.lane.b32.xlu0 %v356, 8
        %v762 = vpop.permute.xlu0 %761
        %763 = vrot.lane.b32.xlu0 %v357, 8
        %v764 = vpop.permute.xlu0 %763
        %765 = vrot.lane.b32.xlu0 %v358, 8
        %v766 = vpop.permute.xlu0 %765
        %767 = vrot.lane.b32.xlu0 %v359, 8
        %v768 = vpop.permute.xlu0 %767
        %769 = vrot.lane.b32.xlu0 %v360, 8
        %v770 = vpop.permute.xlu0 %769
        %771 = vrot.lane.b32.xlu0 %v361, 8
        %v772 = vpop.permute.xlu0 %771
        %773 = vrot.lane.b32.xlu0 %v362, 8
        %v774 = vpop.permute.xlu0 %773
        %775 = vrot.lane.b32.xlu0 %v363, 8
        %v776 = vpop.permute.xlu0 %775
        %777 = vrot.lane.b32.xlu0 %v364, 8
        %v778 = vpop.permute.xlu0 %777
        %779 = vrot.lane.b32.xlu0 %v365, 8
        %v780 = vpop.permute.xlu0 %779
        %781 = vrot.lane.b32.xlu0 %v366, 8
        %v782 = vpop.permute.xlu0 %781
        %783 = vrot.lane.b32.xlu0 %v367, 8
        %v784 = vpop.permute.xlu0 %783
        %785 = vrot.lane.b32.xlu0 %v368, 8
        %v786 = vpop.permute.xlu0 %785
        %787 = vrot.lane.b32.xlu0 %v369, 8
        %v788 = vpop.permute.xlu0 %787
        %789 = vrot.lane.b32.xlu0 %v370, 8
        %v790 = vpop.permute.xlu0 %789
        %791 = vrot.lane.b32.xlu0 %v371, 8
        %v792 = vpop.permute.xlu0 %791
        %793 = vrot.lane.b32.xlu0 %v372, 8
        %v794 = vpop.permute.xlu0 %793
        %859 = vrot.lane.b32.xlu0 %v376, 12
        %v860 = vpop.permute.xlu0 %859
        %861 = vrot.lane.b32.xlu0 %v377, 12
        %v862 = vpop.permute.xlu0 %861
        %863 = vrot.lane.b32.xlu0 %v378, 12
        %v864 = vpop.permute.xlu0 %863
        %865 = vrot.lane.b32.xlu0 %v379, 12
        %v866 = vpop.permute.xlu0 %865
        %867 = vrot.lane.b32.xlu0 %v380, 12
        %v868 = vpop.permute.xlu0 %867
        %869 = vrot.lane.b32.xlu0 %v381, 12
        %v870 = vpop.permute.xlu0 %869
        %871 = vrot.lane.b32.xlu0 %v382, 12
        %v872 = vpop.permute.xlu0 %871
        %873 = vrot.lane.b32.xlu0 %v383, 12
        %v874 = vpop.permute.xlu0 %873
        %875 = vrot.lane.b32.xlu0 %v384, 12
        %v876 = vpop.permute.xlu0 %875
        %877 = vrot.lane.b32.xlu0 %v385, 12
        %v878 = vpop.permute.xlu0 %877
        %879 = vrot.lane.b32.xlu0 %v386, 12
        %v880 = vpop.permute.xlu0 %879
        %881 = vrot.lane.b32.xlu0 %v387, 12
        %v882 = vpop.permute.xlu0 %881
        %883 = vrot.lane.b32.xlu0 %v388, 12
        %v884 = vpop.permute.xlu0 %883
        %885 = vrot.lane.b32.xlu0 %v389, 12
        %v886 = vpop.permute.xlu0 %885
        %887 = vrot.lane.b32.xlu0 %v390, 12
        %v888 = vpop.permute.xlu0 %887
        %889 = vrot.lane.b32.xlu0 %v391, 12
        %v890 = vpop.permute.xlu0 %889
        %891 = vrot.lane.b32.xlu0 %v392, 12
        %v892 = vpop.permute.xlu0 %891
        %893 = vrot.lane.b32.xlu0 %v393, 12
        %v894 = vpop.permute.xlu0 %893
        %895 = vrot.lane.b32.xlu0 %v394, 12
        %v896 = vpop.permute.xlu0 %895
        %897 = vrot.lane.b32.xlu0 %v395, 12
        %v898 = vpop.permute.xlu0 %897
        %899 = vrot.lane.b32.xlu0 %v396, 12
        %v900 = vpop.permute.xlu0 %899
        %901 = vrot.lane.b32.xlu0 %v397, 12
        %v902 = vpop.permute.xlu0 %901
        %903 = vrot.lane.b32.xlu0 %v398, 12
        %v904 = vpop.permute.xlu0 %903
        %905 = vrot.lane.b32.xlu0 %v399, 12
        %v906 = vpop.permute.xlu0 %905
        %907 = vrot.lane.b32.xlu0 %v400, 12
        %v908 = vpop.permute.xlu0 %907
        %909 = vrot.lane.b32.xlu0 %v401, 12
        %v910 = vpop.permute.xlu0 %909
        %911 = vrot.lane.b32.xlu0 %v402, 12
        %v912 = vpop.permute.xlu0 %911
        %913 = vrot.lane.b32.xlu0 %v403, 12
        %v914 = vpop.permute.xlu0 %913
        %915 = vrot.lane.b32.xlu0 %v404, 12
        %v916 = vpop.permute.xlu0 %915
        %917 = vrot.lane.b32.xlu0 %v405, 12
        %v918 = vpop.permute.xlu0 %917
        %919 = vrot.lane.b32.xlu0 %v406, 12
        %v920 = vpop.permute.xlu0 %919
        %921 = vrot.lane.b32.xlu0 %v407, 12
        %v922 = vpop.permute.xlu0 %921
        %987 = vrot.lane.b32.xlu0 %v408, 16
        %v988 = vpop.permute.xlu0 %987
        %989 = vrot.lane.b32.xlu0 %v409, 16
        %v990 = vpop.permute.xlu0 %989
        %991 = vrot.lane.b32.xlu0 %v410, 16
        %v992 = vpop.permute.xlu0 %991
        %993 = vrot.lane.b32.xlu0 %v411, 16
        %v994 = vpop.permute.xlu0 %993
        %995 = vrot.lane.b32.xlu0 %v412, 16
        %v996 = vpop.permute.xlu0 %995
        %997 = vrot.lane.b32.xlu0 %v413, 16
        %v998 = vpop.permute.xlu0 %997
        %999 = vrot.lane.b32.xlu0 %v414, 16
        %v1000 = vpop.permute.xlu0 %999
        %1001 = vrot.lane.b32.xlu0 %v415, 16
        %v1002 = vpop.permute.xlu0 %1001
        %1003 = vrot.lane.b32.xlu0 %v416, 16
        %v1004 = vpop.permute.xlu0 %1003
        %1005 = vrot.lane.b32.xlu0 %v417, 16
        %v1006 = vpop.permute.xlu0 %1005
        %1007 = vrot.lane.b32.xlu0 %v418, 16
        %v1008 = vpop.permute.xlu0 %1007
        %1009 = vrot.lane.b32.xlu0 %v419, 16
        %v1010 = vpop.permute.xlu0 %1009
        %1011 = vrot.lane.b32.xlu0 %v420, 16
        %v1012 = vpop.permute.xlu0 %1011
        %1013 = vrot.lane.b32.xlu0 %v421, 16
        %v1014 = vpop.permute.xlu0 %1013
        %1015 = vrot.lane.b32.xlu0 %v422, 16
        %v1016 = vpop.permute.xlu0 %1015
        %1017 = vrot.lane.b32.xlu0 %v423, 16
        %v1018 = vpop.permute.xlu0 %1017
        %1019 = vrot.lane.b32.xlu0 %v424, 16
        %v1020 = vpop.permute.xlu0 %1019
        %1021 = vrot.lane.b32.xlu0 %v425, 16
        %v1022 = vpop.permute.xlu0 %1021
        %1023 = vrot.lane.b32.xlu0 %v426, 16
        %v1024 = vpop.permute.xlu0 %1023
        %1025 = vrot.lane.b32.xlu0 %v427, 16
        %v1026 = vpop.permute.xlu0 %1025
        %1027 = vrot.lane.b32.xlu0 %v428, 16
        %v1028 = vpop.permute.xlu0 %1027
        %1029 = vrot.lane.b32.xlu0 %v429, 16
        %v1030 = vpop.permute.xlu0 %1029
        %1031 = vrot.lane.b32.xlu0 %v430, 16
        %v1032 = vpop.permute.xlu0 %1031
        %1033 = vrot.lane.b32.xlu0 %v431, 16
        %v1034 = vpop.permute.xlu0 %1033
        %1035 = vrot.lane.b32.xlu0 %v432, 16
        %v1036 = vpop.permute.xlu0 %1035
        %1037 = vrot.lane.b32.xlu0 %v433, 16
        %v1038 = vpop.permute.xlu0 %1037
        %1039 = vrot.lane.b32.xlu0 %v434, 16
        %v1040 = vpop.permute.xlu0 %1039
        %1041 = vrot.lane.b32.xlu0 %v435, 16
        %v1042 = vpop.permute.xlu0 %1041
        %1043 = vrot.lane.b32.xlu0 %v436, 16
        %v1044 = vpop.permute.xlu0 %1043
        %1045 = vrot.lane.b32.xlu0 %v437, 16
        %v1046 = vpop.permute.xlu0 %1045
        %1047 = vrot.lane.b32.xlu0 %v438, 16
        %v1048 = vpop.permute.xlu0 %1047
        %1049 = vrot.lane.b32.xlu0 %v439, 16
        %v1050 = vpop.permute.xlu0 %1049
        %1115 = vrot.lane.b32.xlu0 %v440, 20
        %v1116 = vpop.permute.xlu0 %1115
        %1117 = vrot.lane.b32.xlu0 %v441, 20
        %v1118 = vpop.permute.xlu0 %1117
        %1119 = vrot.lane.b32.xlu0 %v442, 20
        %v1120 = vpop.permute.xlu0 %1119
        %1121 = vrot.lane.b32.xlu0 %v443, 20
        %v1122 = vpop.permute.xlu0 %1121
        %1123 = vrot.lane.b32.xlu0 %v444, 20
        %v1124 = vpop.permute.xlu0 %1123
        %1125 = vrot.lane.b32.xlu0 %v445, 20
        %v1126 = vpop.permute.xlu0 %1125
        %1127 = vrot.lane.b32.xlu0 %v446, 20
        %v1128 = vpop.permute.xlu0 %1127
        %1129 = vrot.lane.b32.xlu0 %v447, 20
        %v1130 = vpop.permute.xlu0 %1129
        %1131 = vrot.lane.b32.xlu0 %v448, 20
        %v1132 = vpop.permute.xlu0 %1131
        %1133 = vrot.lane.b32.xlu0 %v449, 20
        %v1134 = vpop.permute.xlu0 %1133
        %1135 = vrot.lane.b32.xlu0 %v450, 20
        %v1136 = vpop.permute.xlu0 %1135
        %1137 = vrot.lane.b32.xlu0 %v451, 20
        %v1138 = vpop.permute.xlu0 %1137
        %1139 = vrot.lane.b32.xlu0 %v452, 20
        %v1140 = vpop.permute.xlu0 %1139
        %1141 = vrot.lane.b32.xlu0 %v453, 20
        %v1142 = vpop.permute.xlu0 %1141
        %1143 = vrot.lane.b32.xlu0 %v454, 20
        %v1144 = vpop.permute.xlu0 %1143
        %1145 = vrot.lane.b32.xlu0 %v455, 20
        %v1146 = vpop.permute.xlu0 %1145
        %1147 = vrot.lane.b32.xlu0 %v456, 20
        %v1148 = vpop.permute.xlu0 %1147
        %1149 = vrot.lane.b32.xlu0 %v457, 20
        %v1150 = vpop.permute.xlu0 %1149
        %1151 = vrot.lane.b32.xlu0 %v458, 20
        %v1152 = vpop.permute.xlu0 %1151
        %1153 = vrot.lane.b32.xlu0 %v459, 20
        %v1154 = vpop.permute.xlu0 %1153
        %1155 = vrot.lane.b32.xlu0 %v460, 20
        %v1156 = vpop.permute.xlu0 %1155
        %1157 = vrot.lane.b32.xlu0 %v461, 20
        %v1158 = vpop.permute.xlu0 %1157
        %1159 = vrot.lane.b32.xlu0 %v462, 20
        %v1160 = vpop.permute.xlu0 %1159
        %1161 = vrot.lane.b32.xlu0 %v463, 20
        %v1162 = vpop.permute.xlu0 %1161
        %1163 = vrot.lane.b32.xlu0 %v464, 20
        %v1164 = vpop.permute.xlu0 %1163
        %1165 = vrot.lane.b32.xlu0 %v465, 20
        %v1166 = vpop.permute.xlu0 %1165
        %1167 = vrot.lane.b32.xlu0 %v466, 20
        %v1168 = vpop.permute.xlu0 %1167
        %1169 = vrot.lane.b32.xlu0 %v467, 20
        %v1170 = vpop.permute.xlu0 %1169
        %1171 = vrot.lane.b32.xlu0 %v468, 20
        %v1172 = vpop.permute.xlu0 %1171
        %1173 = vrot.lane.b32.xlu0 %v469, 20
        %v1174 = vpop.permute.xlu0 %1173
        %1175 = vrot.lane.b32.xlu0 %v470, 20
        %v1176 = vpop.permute.xlu0 %1175
        %1177 = vrot.lane.b32.xlu0 %v471, 20
        %v1178 = vpop.permute.xlu0 %1177
        %1243 = vrot.lane.b32.xlu0 %v475, 24
        %v1244 = vpop.permute.xlu0 %1243
        %1245 = vrot.lane.b32.xlu0 %v476, 24
        %v1246 = vpop.permute.xlu0 %1245
        %1247 = vrot.lane.b32.xlu0 %v477, 24
        %v1248 = vpop.permute.xlu0 %1247
        %1249 = vrot.lane.b32.xlu0 %v478, 24
        %v1250 = vpop.permute.xlu0 %1249
        %1251 = vrot.lane.b32.xlu0 %v479, 24
        %v1252 = vpop.permute.xlu0 %1251
        %1253 = vrot.lane.b32.xlu0 %v480, 24
        %v1254 = vpop.permute.xlu0 %1253
        %1255 = vrot.lane.b32.xlu0 %v481, 24
        %v1256 = vpop.permute.xlu0 %1255
        %1257 = vrot.lane.b32.xlu0 %v482, 24
        %v1258 = vpop.permute.xlu0 %1257
        %1259 = vrot.lane.b32.xlu0 %v483, 24
        %v1260 = vpop.permute.xlu0 %1259
        %1261 = vrot.lane.b32.xlu0 %v484, 24
        %v1262 = vpop.permute.xlu0 %1261
        %1263 = vrot.lane.b32.xlu0 %v485, 24
        %v1264 = vpop.permute.xlu0 %1263
        %1265 = vrot.lane.b32.xlu0 %v486, 24
        %v1266 = vpop.permute.xlu0 %1265
        %1267 = vrot.lane.b32.xlu0 %v487, 24
        %v1268 = vpop.permute.xlu0 %1267
        %1269 = vrot.lane.b32.xlu0 %v488, 24
        %v1270 = vpop.permute.xlu0 %1269
        %1271 = vrot.lane.b32.xlu0 %v489, 24
        %v1272 = vpop.permute.xlu0 %1271
        %1273 = vrot.lane.b32.xlu0 %v490, 24
        %v1274 = vpop.permute.xlu0 %1273
        %1275 = vrot.lane.b32.xlu0 %v491, 24
        %v1276 = vpop.permute.xlu0 %1275
        %1277 = vrot.lane.b32.xlu0 %v492, 24
        %v1278 = vpop.permute.xlu0 %1277
        %1279 = vrot.lane.b32.xlu0 %v493, 24
        %v1280 = vpop.permute.xlu0 %1279
        %1281 = vrot.lane.b32.xlu0 %v494, 24
        %v1282 = vpop.permute.xlu0 %1281
        %1283 = vrot.lane.b32.xlu0 %v495, 24
        %v1284 = vpop.permute.xlu0 %1283
        %1285 = vrot.lane.b32.xlu0 %v496, 24
        %v1286 = vpop.permute.xlu0 %1285
        %1287 = vrot.lane.b32.xlu0 %v497, 24
        %v1288 = vpop.permute.xlu0 %1287
        %1289 = vrot.lane.b32.xlu0 %v498, 24
        %v1290 = vpop.permute.xlu0 %1289
        %1291 = vrot.lane.b32.xlu0 %v499, 24
        %v1292 = vpop.permute.xlu0 %1291
        %1293 = vrot.lane.b32.xlu0 %v500, 24
        %v1294 = vpop.permute.xlu0 %1293
        %1295 = vrot.lane.b32.xlu0 %v501, 24
        %v1296 = vpop.permute.xlu0 %1295
        %1297 = vrot.lane.b32.xlu0 %v502, 24
        %v1298 = vpop.permute.xlu0 %1297
        %1299 = vrot.lane.b32.xlu0 %v503, 24
        %v1300 = vpop.permute.xlu0 %1299
        %1301 = vrot.lane.b32.xlu0 %v504, 24
        %v1302 = vpop.permute.xlu0 %1301
        %1303 = vrot.lane.b32.xlu0 %v505, 24
        %v1304 = vpop.permute.xlu0 %1303
        %1305 = vrot.lane.b32.xlu0 %v506, 24
        %v1306 = vpop.permute.xlu0 %1305
        %1371 = vrot.lane.b32.xlu0 %v507, 28
        %v1372 = vpop.permute.xlu0 %1371
        %1373 = vrot.lane.b32.xlu0 %v508, 28
        %v1374 = vpop.permute.xlu0 %1373
        %1375 = vrot.lane.b32.xlu0 %v509, 28
        %v1376 = vpop.permute.xlu0 %1375
        %1377 = vrot.lane.b32.xlu0 %v510, 28
        %v1378 = vpop.permute.xlu0 %1377
        %1379 = vrot.lane.b32.xlu0 %v511, 28
        %v1380 = vpop.permute.xlu0 %1379
        %1381 = vrot.lane.b32.xlu0 %v512, 28
        %v1382 = vpop.permute.xlu0 %1381
        %1383 = vrot.lane.b32.xlu0 %v513, 28
        %v1384 = vpop.permute.xlu0 %1383
        %1385 = vrot.lane.b32.xlu0 %v514, 28
        %v1386 = vpop.permute.xlu0 %1385
        %1387 = vrot.lane.b32.xlu0 %v515, 28
        %v1388 = vpop.permute.xlu0 %1387
        %1389 = vrot.lane.b32.xlu0 %v516, 28
        %v1390 = vpop.permute.xlu0 %1389
        %1391 = vrot.lane.b32.xlu0 %v517, 28
        %v1392 = vpop.permute.xlu0 %1391
        %1393 = vrot.lane.b32.xlu0 %v518, 28
        %v1394 = vpop.permute.xlu0 %1393
        %1395 = vrot.lane.b32.xlu0 %v519, 28
        %v1396 = vpop.permute.xlu0 %1395
        %1397 = vrot.lane.b32.xlu0 %v520, 28
        %v1398 = vpop.permute.xlu0 %1397
        %1399 = vrot.lane.b32.xlu0 %v521, 28
        %v1400 = vpop.permute.xlu0 %1399
        %1401 = vrot.lane.b32.xlu0 %v522, 28
        %v1402 = vpop.permute.xlu0 %1401
        %1403 = vrot.lane.b32.xlu0 %v523, 28
        %v1404 = vpop.permute.xlu0 %1403
        %1405 = vrot.lane.b32.xlu0 %v524, 28
        %v1406 = vpop.permute.xlu0 %1405
        %1407 = vrot.lane.b32.xlu0 %v525, 28
        %v1408 = vpop.permute.xlu0 %1407
        %1409 = vrot.lane.b32.xlu0 %v526, 28
        %v1410 = vpop.permute.xlu0 %1409
        %1411 = vrot.lane.b32.xlu0 %v527, 28
        %v1412 = vpop.permute.xlu0 %1411
        %1413 = vrot.lane.b32.xlu0 %v528, 28
        %v1414 = vpop.permute.xlu0 %1413
        %1415 = vrot.lane.b32.xlu0 %v529, 28
        %v1416 = vpop.permute.xlu0 %1415
        %1417 = vrot.lane.b32.xlu0 %v530, 28
        %v1418 = vpop.permute.xlu0 %1417
        %1419 = vrot.lane.b32.xlu0 %v531, 28
        %v1420 = vpop.permute.xlu0 %1419
        %1421 = vrot.lane.b32.xlu0 %v532, 28
        %v1422 = vpop.permute.xlu0 %1421
        %1423 = vrot.lane.b32.xlu0 %v533, 28
        %v1424 = vpop.permute.xlu0 %1423
        %1425 = vrot.lane.b32.xlu0 %v534, 28
        %v1426 = vpop.permute.xlu0 %1425
        %1427 = vrot.lane.b32.xlu0 %v535, 28
        %v1428 = vpop.permute.xlu0 %1427
        %1429 = vrot.lane.b32.xlu0 %v536, 28
        %v1430 = vpop.permute.xlu0 %1429
        %1431 = vrot.lane.b32.xlu0 %v537, 28
        %v1432 = vpop.permute.xlu0 %1431
        %1433 = vrot.lane.b32.xlu0 %v538, 28
        %v1434 = vpop.permute.xlu0 %1433
        %1499 = vrot.lane.b32.xlu0 %v539, 32
        %v1500 = vpop.permute.xlu0 %1499
        %1501 = vrot.lane.b32.xlu0 %v540, 32
        %v1502 = vpop.permute.xlu0 %1501
        %1503 = vrot.lane.b32.xlu0 %v541, 32
        %v1504 = vpop.permute.xlu0 %1503
        %1505 = vrot.lane.b32.xlu0 %v542, 32
        %v1506 = vpop.permute.xlu0 %1505
        %1507 = vrot.lane.b32.xlu0 %v543, 32
        %v1508 = vpop.permute.xlu0 %1507
        %1509 = vrot.lane.b32.xlu0 %v544, 32
        %v1510 = vpop.permute.xlu0 %1509
        %1511 = vrot.lane.b32.xlu0 %v545, 32
        %v1512 = vpop.permute.xlu0 %1511
        %1513 = vrot.lane.b32.xlu0 %v546, 32
        %v1514 = vpop.permute.xlu0 %1513
        %1515 = vrot.lane.b32.xlu0 %v547, 32
        %v1516 = vpop.permute.xlu0 %1515
        %1517 = vrot.lane.b32.xlu0 %v548, 32
        %v1518 = vpop.permute.xlu0 %1517
        %1519 = vrot.lane.b32.xlu0 %v549, 32
        %v1520 = vpop.permute.xlu0 %1519
        %1521 = vrot.lane.b32.xlu0 %v550, 32
        %v1522 = vpop.permute.xlu0 %1521
        %1523 = vrot.lane.b32.xlu0 %v551, 32
        %v1524 = vpop.permute.xlu0 %1523
        %1525 = vrot.lane.b32.xlu0 %v552, 32
        %v1526 = vpop.permute.xlu0 %1525
        %1527 = vrot.lane.b32.xlu0 %v553, 32
        %v1528 = vpop.permute.xlu0 %1527
        %1529 = vrot.lane.b32.xlu0 %v554, 32
        %v1530 = vpop.permute.xlu0 %1529
        %1531 = vrot.lane.b32.xlu0 %v555, 32
        %v1532 = vpop.permute.xlu0 %1531
        %1533 = vrot.lane.b32.xlu0 %v556, 32
        %v1534 = vpop.permute.xlu0 %1533
        %1535 = vrot.lane.b32.xlu0 %v557, 32
        %v1536 = vpop.permute.xlu0 %1535
        %1537 = vrot.lane.b32.xlu0 %v558, 32
        %v1538 = vpop.permute.xlu0 %1537
        %1539 = vrot.lane.b32.xlu0 %v559, 32
        %v1540 = vpop.permute.xlu0 %1539
        %1541 = vrot.lane.b32.xlu0 %v560, 32
        %v1542 = vpop.permute.xlu0 %1541
        %1543 = vrot.lane.b32.xlu0 %v561, 32
        %v1544 = vpop.permute.xlu0 %1543
        %1545 = vrot.lane.b32.xlu0 %v562, 32
        %v1546 = vpop.permute.xlu0 %1545
        %1547 = vrot.lane.b32.xlu0 %v563, 32
        %v1548 = vpop.permute.xlu0 %1547
        %1549 = vrot.lane.b32.xlu0 %v564, 32
        %v1550 = vpop.permute.xlu0 %1549
        %1551 = vrot.lane.b32.xlu0 %v565, 32
        %v1552 = vpop.permute.xlu0 %1551
        %1553 = vrot.lane.b32.xlu0 %v566, 32
        %v1554 = vpop.permute.xlu0 %1553
        %1555 = vrot.lane.b32.xlu0 %v567, 32
        %v1556 = vpop.permute.xlu0 %1555
        %1557 = vrot.lane.b32.xlu0 %v568, 32
        %v1558 = vpop.permute.xlu0 %1557
        %1559 = vrot.lane.b32.xlu0 %v569, 32
        %v1560 = vpop.permute.xlu0 %1559
        %1561 = vrot.lane.b32.xlu0 %v570, 32
        %v1562 = vpop.permute.xlu0 %1561
        %vm1595 = vcmask 31744
        %v1596 = vsel %vm1595, %v277, %v604
        %v1597 = vsel %vm1595, %v278, %v606
        %v1598 = vsel %vm1595, %v279, %v608
        %v1599 = vsel %vm1595, %v280, %v610
        %v1600 = vsel %vm1595, %v281, %v612
        %v1601 = vsel %vm1595, %v282, %v614
        %v1602 = vsel %vm1595, %v283, %v616
        %v1603 = vsel %vm1595, %v284, %v618
        %v1604 = vsel %vm1595, %v285, %v620
        %v1605 = vsel %vm1595, %v286, %v622
        %v1606 = vsel %vm1595, %v287, %v624
        %v1607 = vsel %vm1595, %v288, %v626
        %v1608 = vsel %vm1595, %v289, %v628
        %v1609 = vsel %vm1595, %v290, %v630
        %v1610 = vsel %vm1595, %v291, %v632
        %v1611 = vsel %vm1595, %v292, %v634
        %v1612 = vsel %vm1595, %v293, %v636
        %v1613 = vsel %vm1595, %v294, %v638
        %v1614 = vsel %vm1595, %v295, %v640
        %v1615 = vsel %vm1595, %v296, %v642
        %v1616 = vsel %vm1595, %v297, %v644
        %v1617 = vsel %vm1595, %v298, %v646
        %v1618 = vsel %vm1595, %v299, %v648
        %v1619 = vsel %vm1595, %v300, %v650
        %v1620 = vsel %vm1595, %v301, %v652
        %v1621 = vsel %vm1595, %v302, %v654
        %v1622 = vsel %vm1595, %v303, %v656
        %v1623 = vsel %vm1595, %v304, %v658
        %v1624 = vsel %vm1595, %v305, %v660
        %v1625 = vsel %vm1595, %v306, %v662
        %v1626 = vsel %vm1595, %v307, %v664
        %v1627 = vsel %vm1595, %v308, %v666
        %vm1628 = vcmask 64512
        %v1629 = vsel %vm1628, %v1596, %v732
        %v1630 = vsel %vm1628, %v1597, %v734
        %v1631 = vsel %vm1628, %v1598, %v736
        %v1632 = vsel %vm1628, %v1599, %v738
        %v1633 = vsel %vm1628, %v1600, %v740
        %v1634 = vsel %vm1628, %v1601, %v742
        %v1635 = vsel %vm1628, %v1602, %v744
        %v1636 = vsel %vm1628, %v1603, %v746
        %v1637 = vsel %vm1628, %v1604, %v748
        %v1638 = vsel %vm1628, %v1605, %v750
        %v1639 = vsel %vm1628, %v1606, %v752
        %v1640 = vsel %vm1628, %v1607, %v754
        %v1641 = vsel %vm1628, %v1608, %v756
        %v1642 = vsel %vm1628, %v1609, %v758
        %v1643 = vsel %vm1628, %v1610, %v760
        %v1644 = vsel %vm1628, %v1611, %v762
        %v1645 = vsel %vm1628, %v1612, %v764
        %v1646 = vsel %vm1628, %v1613, %v766
        %v1647 = vsel %vm1628, %v1614, %v768
        %v1648 = vsel %vm1628, %v1615, %v770
        %v1649 = vsel %vm1628, %v1616, %v772
        %v1650 = vsel %vm1628, %v1617, %v774
        %v1651 = vsel %vm1628, %v1618, %v776
        %v1652 = vsel %vm1628, %v1619, %v778
        %v1653 = vsel %vm1628, %v1620, %v780
        %v1654 = vsel %vm1628, %v1621, %v782
        %v1655 = vsel %vm1628, %v1622, %v784
        %v1656 = vsel %vm1628, %v1623, %v786
        %v1657 = vsel %vm1628, %v1624, %v788
        %v1658 = vsel %vm1628, %v1625, %v790
        %v1659 = vsel %vm1628, %v1626, %v792
        %v1660 = vsel %vm1628, %v1627, %v794
        %vm1661 = vcmask 97280
        %v1662 = vsel %vm1661, %v1629, %v860
        %v1663 = vsel %vm1661, %v1630, %v862
        %v1664 = vsel %vm1661, %v1631, %v864
        %v1665 = vsel %vm1661, %v1632, %v866
        %v1666 = vsel %vm1661, %v1633, %v868
        %v1667 = vsel %vm1661, %v1634, %v870
        %v1668 = vsel %vm1661, %v1635, %v872
        %v1669 = vsel %vm1661, %v1636, %v874
        %v1670 = vsel %vm1661, %v1637, %v876
        %v1671 = vsel %vm1661, %v1638, %v878
        %v1672 = vsel %vm1661, %v1639, %v880
        %v1673 = vsel %vm1661, %v1640, %v882
        %v1674 = vsel %vm1661, %v1641, %v884
        %v1675 = vsel %vm1661, %v1642, %v886
        %v1676 = vsel %vm1661, %v1643, %v888
        %v1677 = vsel %vm1661, %v1644, %v890
        %v1678 = vsel %vm1661, %v1645, %v892
        %v1679 = vsel %vm1661, %v1646, %v894
        %v1680 = vsel %vm1661, %v1647, %v896
        %v1681 = vsel %vm1661, %v1648, %v898
        %v1682 = vsel %vm1661, %v1649, %v900
        %v1683 = vsel %vm1661, %v1650, %v902
        %v1684 = vsel %vm1661, %v1651, %v904
        %v1685 = vsel %vm1661, %v1652, %v906
        %v1686 = vsel %vm1661, %v1653, %v908
        %v1687 = vsel %vm1661, %v1654, %v910
        %v1688 = vsel %vm1661, %v1655, %v912
        %v1689 = vsel %vm1661, %v1656, %v914
        %v1690 = vsel %vm1661, %v1657, %v916
        %v1691 = vsel %vm1661, %v1658, %v918
        %v1692 = vsel %vm1661, %v1659, %v920
        %v1693 = vsel %vm1661, %v1660, %v922
        %vm1694 = vcmask 130048
        %v1695 = vsel %vm1694, %v1662, %v988
        %v1696 = vsel %vm1694, %v1663, %v990
        %v1697 = vsel %vm1694, %v1664, %v992
        %v1698 = vsel %vm1694, %v1665, %v994
        %v1699 = vsel %vm1694, %v1666, %v996
        %v1700 = vsel %vm1694, %v1667, %v998
        %v1701 = vsel %vm1694, %v1668, %v1000
        %v1702 = vsel %vm1694, %v1669, %v1002
        %v1703 = vsel %vm1694, %v1670, %v1004
        %v1704 = vsel %vm1694, %v1671, %v1006
        %v1705 = vsel %vm1694, %v1672, %v1008
        %v1706 = vsel %vm1694, %v1673, %v1010
        %v1707 = vsel %vm1694, %v1674, %v1012
        %v1708 = vsel %vm1694, %v1675, %v1014
        %v1709 = vsel %vm1694, %v1676, %v1016
        %v1710 = vsel %vm1694, %v1677, %v1018
        %v1711 = vsel %vm1694, %v1678, %v1020
        %v1712 = vsel %vm1694, %v1679, %v1022
        %v1713 = vsel %vm1694, %v1680, %v1024
        %v1714 = vsel %vm1694, %v1681, %v1026
        %v1715 = vsel %vm1694, %v1682, %v1028
        %v1716 = vsel %vm1694, %v1683, %v1030
        %v1717 = vsel %vm1694, %v1684, %v1032
        %v1718 = vsel %vm1694, %v1685, %v1034
        %v1719 = vsel %vm1694, %v1686, %v1036
        %v1720 = vsel %vm1694, %v1687, %v1038
        %v1721 = vsel %vm1694, %v1688, %v1040
        %v1722 = vsel %vm1694, %v1689, %v1042
        %v1723 = vsel %vm1694, %v1690, %v1044
        %v1724 = vsel %vm1694, %v1691, %v1046
        %v1725 = vsel %vm1694, %v1692, %v1048
        %v1726 = vsel %vm1694, %v1693, %v1050
        %vm1727 = vcmask 162816
        %v1728 = vsel %vm1727, %v1695, %v1116
        %v1729 = vsel %vm1727, %v1696, %v1118
        %v1730 = vsel %vm1727, %v1697, %v1120
        %v1731 = vsel %vm1727, %v1698, %v1122
        %v1732 = vsel %vm1727, %v1699, %v1124
        %v1733 = vsel %vm1727, %v1700, %v1126
        %v1734 = vsel %vm1727, %v1701, %v1128
        %v1735 = vsel %vm1727, %v1702, %v1130
        %v1736 = vsel %vm1727, %v1703, %v1132
        %v1737 = vsel %vm1727, %v1704, %v1134
        %v1738 = vsel %vm1727, %v1705, %v1136
        %v1739 = vsel %vm1727, %v1706, %v1138
        %v1740 = vsel %vm1727, %v1707, %v1140
        %v1741 = vsel %vm1727, %v1708, %v1142
        %v1742 = vsel %vm1727, %v1709, %v1144
        %v1743 = vsel %vm1727, %v1710, %v1146
        %v1744 = vsel %vm1727, %v1711, %v1148
        %v1745 = vsel %vm1727, %v1712, %v1150
        %v1746 = vsel %vm1727, %v1713, %v1152
        %v1747 = vsel %vm1727, %v1714, %v1154
        %v1748 = vsel %vm1727, %v1715, %v1156
        %v1749 = vsel %vm1727, %v1716, %v1158
        %v1750 = vsel %vm1727, %v1717, %v1160
        %v1751 = vsel %vm1727, %v1718, %v1162
        %v1752 = vsel %vm1727, %v1719, %v1164
        %v1753 = vsel %vm1727, %v1720, %v1166
        %v1754 = vsel %vm1727, %v1721, %v1168
        %v1755 = vsel %vm1727, %v1722, %v1170
        %v1756 = vsel %vm1727, %v1723, %v1172
        %v1757 = vsel %vm1727, %v1724, %v1174
        %v1758 = vsel %vm1727, %v1725, %v1176
        %v1759 = vsel %vm1727, %v1726, %v1178
        %vm1760 = vcmask 195584
        %v1761 = vsel %vm1760, %v1728, %v1244
        %v1762 = vsel %vm1760, %v1729, %v1246
        %v1763 = vsel %vm1760, %v1730, %v1248
        %v1764 = vsel %vm1760, %v1731, %v1250
        %v1765 = vsel %vm1760, %v1732, %v1252
        %v1766 = vsel %vm1760, %v1733, %v1254
        %v1767 = vsel %vm1760, %v1734, %v1256
        %v1768 = vsel %vm1760, %v1735, %v1258
        %v1769 = vsel %vm1760, %v1736, %v1260
        %v1770 = vsel %vm1760, %v1737, %v1262
        %v1771 = vsel %vm1760, %v1738, %v1264
        %v1772 = vsel %vm1760, %v1739, %v1266
        %v1773 = vsel %vm1760, %v1740, %v1268
        %v1774 = vsel %vm1760, %v1741, %v1270
        %v1775 = vsel %vm1760, %v1742, %v1272
        %v1776 = vsel %vm1760, %v1743, %v1274
        %v1777 = vsel %vm1760, %v1744, %v1276
        %v1778 = vsel %vm1760, %v1745, %v1278
        %v1779 = vsel %vm1760, %v1746, %v1280
        %v1780 = vsel %vm1760, %v1747, %v1282
        %v1781 = vsel %vm1760, %v1748, %v1284
        %v1782 = vsel %vm1760, %v1749, %v1286
        %v1783 = vsel %vm1760, %v1750, %v1288
        %v1784 = vsel %vm1760, %v1751, %v1290
        %v1785 = vsel %vm1760, %v1752, %v1292
        %v1786 = vsel %vm1760, %v1753, %v1294
        %v1787 = vsel %vm1760, %v1754, %v1296
        %v1788 = vsel %vm1760, %v1755, %v1298
        %v1789 = vsel %vm1760, %v1756, %v1300
        %v1790 = vsel %vm1760, %v1757, %v1302
        %v1791 = vsel %vm1760, %v1758, %v1304
        %v1792 = vsel %vm1760, %v1759, %v1306
        %vm1793 = vcmask 228352
        %v1794 = vsel %vm1793, %v1761, %v1372
        %v1795 = vsel %vm1793, %v1762, %v1374
        %v1796 = vsel %vm1793, %v1763, %v1376
        %v1797 = vsel %vm1793, %v1764, %v1378
        %v1798 = vsel %vm1793, %v1765, %v1380
        %v1799 = vsel %vm1793, %v1766, %v1382
        %v1800 = vsel %vm1793, %v1767, %v1384
        %v1801 = vsel %vm1793, %v1768, %v1386
        %v1802 = vsel %vm1793, %v1769, %v1388
        %v1803 = vsel %vm1793, %v1770, %v1390
        %v1804 = vsel %vm1793, %v1771, %v1392
        %v1805 = vsel %vm1793, %v1772, %v1394
        %v1806 = vsel %vm1793, %v1773, %v1396
        %v1807 = vsel %vm1793, %v1774, %v1398
        %v1808 = vsel %vm1793, %v1775, %v1400
        %v1809 = vsel %vm1793, %v1776, %v1402
        %v1810 = vsel %vm1793, %v1777, %v1404
        %v1811 = vsel %vm1793, %v1778, %v1406
        %v1812 = vsel %vm1793, %v1779, %v1408
        %v1813 = vsel %vm1793, %v1780, %v1410
        %v1814 = vsel %vm1793, %v1781, %v1412
        %v1815 = vsel %vm1793, %v1782, %v1414
        %v1816 = vsel %vm1793, %v1783, %v1416
        %v1817 = vsel %vm1793, %v1784, %v1418
        %v1818 = vsel %vm1793, %v1785, %v1420
        %v1819 = vsel %vm1793, %v1786, %v1422
        %v1820 = vsel %vm1793, %v1787, %v1424
        %v1821 = vsel %vm1793, %v1788, %v1426
        %v1822 = vsel %vm1793, %v1789, %v1428
        %v1823 = vsel %vm1793, %v1790, %v1430
        %v1824 = vsel %vm1793, %v1791, %v1432
        %v1825 = vsel %vm1793, %v1792, %v1434
        %vm1826 = vcmask 261120
        %v1827 = vsel %vm1826, %v1794, %v1500
        %v1828 = vsel %vm1826, %v1795, %v1502
        %v1829 = vsel %vm1826, %v1796, %v1504
        %v1830 = vsel %vm1826, %v1797, %v1506
        %v1831 = vsel %vm1826, %v1798, %v1508
        %v1832 = vsel %vm1826, %v1799, %v1510
        %v1833 = vsel %vm1826, %v1800, %v1512
        %v1834 = vsel %vm1826, %v1801, %v1514
        %v1835 = vsel %vm1826, %v1802, %v1516
        %v1836 = vsel %vm1826, %v1803, %v1518
        %v1837 = vsel %vm1826, %v1804, %v1520
        %v1838 = vsel %vm1826, %v1805, %v1522
        %v1839 = vsel %vm1826, %v1806, %v1524
        %v1840 = vsel %vm1826, %v1807, %v1526
        %v1841 = vsel %vm1826, %v1808, %v1528
        %v1842 = vsel %vm1826, %v1809, %v1530
        %v1843 = vsel %vm1826, %v1810, %v1532
        %v1844 = vsel %vm1826, %v1811, %v1534
        %v1845 = vsel %vm1826, %v1812, %v1536
        %v1846 = vsel %vm1826, %v1813, %v1538
        %v1847 = vsel %vm1826, %v1814, %v1540
        %v1848 = vsel %vm1826, %v1815, %v1542
        %v1849 = vsel %vm1826, %v1816, %v1544
        %v1850 = vsel %vm1826, %v1817, %v1546
        %v1851 = vsel %vm1826, %v1818, %v1548
        %v1852 = vsel %vm1826, %v1819, %v1550
        %v1853 = vsel %vm1826, %v1820, %v1552
        %v1854 = vsel %vm1826, %v1821, %v1554
        %v1855 = vsel %vm1826, %v1822, %v1556
        %v1856 = vsel %vm1826, %v1823, %v1558
        %v1857 = vsel %vm1826, %v1824, %v1560
        %v1858 = vsel %vm1826, %v1825, %v1562
        %v1859 = vld [vmem:[#allocation5] sm:$0xff]
        %v1860 = vld [vmem:[#allocation5 + $0x8] sm:$0xff]
        %v1861 = vld [vmem:[#allocation5 + $0x10] sm:$0xff]
        %v1862 = vld [vmem:[#allocation5 + $0x18] sm:$0xff]
        %v1863 = vld [vmem:[#allocation5 + $0x20] sm:$0xf]
        %v1864 = vld [vmem:[#allocation7] sm:$0x1]
        %v1866 = vlaneseq
        %v1867 = vshrl.u32 %v1866, 7
        %v1868 = vsub.s32 0, %v1867
        %v1869 = vrot.slane %v1864, %v1868
        %vm1871 = vcmask 293888
        %v1873 = vsel %vm1871, %v1827, 0
        %v1876 = vsel %vm1871, %v1828, 0
        %v1879 = vsel %vm1871, %v1829, 0
        %v1882 = vsel %vm1871, %v1830, 0
        %v1885 = vsel %vm1871, %v1831, 0
        %v1888 = vsel %vm1871, %v1832, 0
        %v1891 = vsel %vm1871, %v1833, 0
        %v1894 = vsel %vm1871, %v1834, 0
        %v1897 = vsel %vm1871, %v1835, 0
        %v1900 = vsel %vm1871, %v1836, 0
        %v1903 = vsel %vm1871, %v1837, 0
        %v1906 = vsel %vm1871, %v1838, 0
        %v1909 = vsel %vm1871, %v1839, 0
        %v1912 = vsel %vm1871, %v1840, 0
        %v1915 = vsel %vm1871, %v1841, 0
        %v1918 = vsel %vm1871, %v1842, 0
        %v1921 = vsel %vm1871, %v1843, 0
        %v1924 = vsel %vm1871, %v1844, 0
        %v1927 = vsel %vm1871, %v1845, 0
        %v1930 = vsel %vm1871, %v1846, 0
        %v1933 = vsel %vm1871, %v1847, 0
        %v1936 = vsel %vm1871, %v1848, 0
        %v1939 = vsel %vm1871, %v1849, 0
        %v1942 = vsel %vm1871, %v1850, 0
        %v1945 = vsel %vm1871, %v1851, 0
        %v1948 = vsel %vm1871, %v1852, 0
        %v1951 = vsel %vm1871, %v1853, 0
        %v1954 = vsel %vm1871, %v1854, 0
        %v1957 = vsel %vm1871, %v1855, 0
        %v1960 = vsel %vm1871, %v1856, 0
        %v1963 = vsel %vm1871, %v1857, 0
        %v1966 = vsel %vm1871, %v1858, 0
        %vm1968 = vcmask 1043456
        %v1970 = vsel %vm1968, %v1863, 0
        %1972 = vmatprep.subr.mxu0 0.0
        %1973 = vmatpush1.msra.mxu0 %v1859
        %1974 = vmatprep.subr.mxu0 0.0
        %1975 = vmatpush1.msra.mxu0 %v1860
        %1976 = vmatprep.subr.mxu0 0.0
        %1977 = vmatpush1.msra.mxu0 %v1861
        %1978 = vmatprep.subr.mxu0 0.0
        %1979 = vmatpush1.msra.mxu0 %v1862
        %1980 = vmatprep.subr.mxu0 0.0
        %1981 = vmatpush1.msra.mxu0 %v1970
        %1982 = vmatprep.subr.mxu0 0.0
        %1983 = vmatpush1.msra.mxu0 0.0
        %1984 = vmatprep.subr.mxu0 0.0
        %1985 = vmatpush1.msra.mxu0 0.0
        %1986 = vmatprep.subr.mxu0 0.0
        %1987 = vmatpush1.msra.mxu0 0.0
        %1988 = vmatprep.subr.mxu0 0.0
        %1989 = vmatpush1.msra.mxu0 0.0
        %1990 = vmatprep.subr.mxu0 0.0
        %1991 = vmatpush1.msra.mxu0 0.0
        %1992 = vmatprep.subr.mxu0 0.0
        %1993 = vmatpush1.msra.mxu0 0.0
        %1994 = vmatprep.subr.mxu0 0.0
        %1995 = vmatpush1.msra.mxu0 0.0
        %1996 = vmatprep.subr.mxu0 0.0
        %1997 = vmatpush1.msra.mxu0 0.0
        %1998 = vmatprep.subr.mxu0 0.0
        %1999 = vmatpush1.msra.mxu0 0.0
        %2000 = vmatprep.subr.mxu0 0.0
        %2001 = vmatpush1.msra.mxu0 0.0
        %2002 = vmatprep.subr.mxu0 0.0
        %2003 = vmatpush1.msra.mxu0 0.0
        %2004 = vmatprep.subr.mxu0 0.0
        %2005 = vmatpush1.msra.mxu0 0.0
        %2006 = vmatprep.subr.mxu0 0.0
        %2007 = vmatpush1.msra.mxu0 0.0
        %2008 = vmatprep.subr.mxu0 0.0
        %2009 = vmatpush1.msra.mxu0 0.0
        %2010 = vmatprep.subr.mxu0 0.0
        %2011 = vmatpush1.msra.mxu0 0.0
        %2012 = vmatprep.subr.mxu0 0.0
        %2013 = vmatpush1.msra.mxu0 0.0
        %2014 = vmatprep.subr.mxu0 0.0
        %2015 = vmatpush1.msra.mxu0 0.0
        %2016 = vmatprep.subr.mxu0 0.0
        %2017 = vmatpush1.msra.mxu0 0.0
        %2018 = vmatprep.subr.mxu0 0.0
        %2019 = vmatpush1.msra.mxu0 0.0
        %2020 = vmatprep.subr.mxu0 0.0
        %2021 = vmatpush1.msra.mxu0 0.0
        %2022 = vmatprep.subr.mxu0 0.0
        %2023 = vmatpush1.msra.mxu0 0.0
        %2024 = vmatprep.subr.mxu0 0.0
        %2025 = vmatpush1.msra.mxu0 0.0
        %2026 = vmatprep.subr.mxu0 0.0
        %2027 = vmatpush1.msra.mxu0 0.0
        %2028 = vmatprep.subr.mxu0 0.0
        %2029 = vmatpush1.msra.mxu0 0.0
        %2030 = vmatprep.subr.mxu0 0.0
        %2031 = vmatpush1.msra.mxu0 0.0
        %2032 = vmatprep.subr.mxu0 0.0
        %2033 = vmatpush1.msra.mxu0 0.0
        %2034 = vmatprep.subr.mxu0 0.0
        %2035 = vmatpush1.msra.mxu0 0.0
        %2036 = vmatprep.mubr.f32.mxu0 0.0
        %2037 = vmatmul.mubr.f32.gmra.mrb[0].mxu0 %v1873
        %v2038 = vpop.f32.mrb[0].mxu0
        %v2039 = vadd.f32 %v1869, %v2038
        %v2040 = vpop.f32.mrb[0].mxu0
        %2041 = vmatprep.mubr.f32.mxu0 0.0
        %2042 = vmatmul.mubr.f32.gmra.mrb[0].mxu0 %v1876
        %v2043 = vpop.f32.mrb[0].mxu0
        %v2044 = vadd.f32 %v1869, %v2043
        %v2045 = vpop.f32.mrb[0].mxu0
        %2046 = vmatprep.mubr.f32.mxu0 0.0
        %2047 = vmatmul.mubr.f32.gmra.mrb[0].mxu0 %v1879
        %v2048 = vpop.f32.mrb[0].mxu0
        %v2049 = vadd.f32 %v1869, %v2048
        %v2050 = vpop.f32.mrb[0].mxu0
        %2051 = vmatprep.mubr.f32.mxu0 0.0
        %2052 = vmatmul.mubr.f32.gmra.mrb[0].mxu0 %v1882
        %v2053 = vpop.f32.mrb[0].mxu0
        %v2054 = vadd.f32 %v1869, %v2053
        %v2055 = vpop.f32.mrb[0].mxu0
        %2056 = vmatprep.mubr.f32.mxu0 0.0
        %2057 = vmatmul.mubr.f32.gmra.mrb[0].mxu0 %v1885
        %v2058 = vpop.f32.mrb[0].mxu0
        %v2059 = vadd.f32 %v1869, %v2058
        %v2060 = vpop.f32.mrb[0].mxu0
        %2061 = vmatprep.mubr.f32.mxu0 0.0
        %2062 = vmatmul.mubr.f32.gmra.mrb[0].mxu0 %v1888
        %v2063 = vpop.f32.mrb[0].mxu0
        %v2064 = vadd.f32 %v1869, %v2063
        %v2065 = vpop.f32.mrb[0].mxu0
        %2066 = vmatprep.mubr.f32.mxu0 0.0
        %2067 = vmatmul.mubr.f32.gmra.mrb[0].mxu0 %v1891
        %v2068 = vpop.f32.mrb[0].mxu0
        %v2069 = vadd.f32 %v1869, %v2068
        %v2070 = vpop.f32.mrb[0].mxu0
        %2071 = vmatprep.mubr.f32.mxu0 0.0
        %2072 = vmatmul.mubr.f32.gmra.mrb[0].mxu0 %v1894
        %v2073 = vpop.f32.mrb[0].mxu0
        %v2074 = vadd.f32 %v1869, %v2073
        %v2075 = vpop.f32.mrb[0].mxu0
        %2076 = vmatprep.mubr.f32.mxu0 0.0
        %2077 = vmatmul.mubr.f32.gmra.mrb[0].mxu0 %v1897
        %v2078 = vpop.f32.mrb[0].mxu0
        %v2079 = vadd.f32 %v1869, %v2078
        %v2080 = vpop.f32.mrb[0].mxu0
        %2081 = vmatprep.mubr.f32.mxu0 0.0
        %2082 = vmatmul.mubr.f32.gmra.mrb[0].mxu0 %v1900
        %v2083 = vpop.f32.mrb[0].mxu0
        %v2084 = vadd.f32 %v1869, %v2083
        %v2085 = vpop.f32.mrb[0].mxu0
        %2086 = vmatprep.mubr.f32.mxu0 0.0
        %2087 = vmatmul.mubr.f32.gmra.mrb[0].mxu0 %v1903
        %v2088 = vpop.f32.mrb[0].mxu0
        %v2089 = vadd.f32 %v1869, %v2088
        %v2090 = vpop.f32.mrb[0].mxu0
        %2091 = vmatprep.mubr.f32.mxu0 0.0
        %2092 = vmatmul.mubr.f32.gmra.mrb[0].mxu0 %v1906
        %v2093 = vpop.f32.mrb[0].mxu0
        %v2094 = vadd.f32 %v1869, %v2093
        %v2095 = vpop.f32.mrb[0].mxu0
        %2096 = vmatprep.mubr.f32.mxu0 0.0
        %2097 = vmatmul.mubr.f32.gmra.mrb[0].mxu0 %v1909
        %v2098 = vpop.f32.mrb[0].mxu0
        %v2099 = vadd.f32 %v1869, %v2098
        %v2100 = vpop.f32.mrb[0].mxu0
        %2101 = vmatprep.mubr.f32.mxu0 0.0
        %2102 = vmatmul.mubr.f32.gmra.mrb[0].mxu0 %v1912
        %v2103 = vpop.f32.mrb[0].mxu0
        %v2104 = vadd.f32 %v1869, %v2103
        %v2105 = vpop.f32.mrb[0].mxu0
        %2106 = vmatprep.mubr.f32.mxu0 0.0
        %2107 = vmatmul.mubr.f32.gmra.mrb[0].mxu0 %v1915
        %v2108 = vpop.f32.mrb[0].mxu0
        %v2109 = vadd.f32 %v1869, %v2108
        %v2110 = vpop.f32.mrb[0].mxu0
        %2111 = vmatprep.mubr.f32.mxu0 0.0
        %2112 = vmatmul.mubr.f32.gmra.mrb[0].mxu0 %v1918
        %v2113 = vpop.f32.mrb[0].mxu0
        %v2114 = vadd.f32 %v1869, %v2113
        %v2115 = vpop.f32.mrb[0].mxu0
        %2116 = vmatprep.mubr.f32.mxu0 0.0
        %2117 = vmatmul.mubr.f32.gmra.mrb[0].mxu0 %v1921
        %v2118 = vpop.f32.mrb[0].mxu0
        %v2119 = vadd.f32 %v1869, %v2118
        %v2120 = vpop.f32.mrb[0].mxu0
        %2121 = vmatprep.mubr.f32.mxu0 0.0
        %2122 = vmatmul.mubr.f32.gmra.mrb[0].mxu0 %v1924
        %v2123 = vpop.f32.mrb[0].mxu0
        %v2124 = vadd.f32 %v1869, %v2123
        %v2125 = vpop.f32.mrb[0].mxu0
        %2126 = vmatprep.mubr.f32.mxu0 0.0
        %2127 = vmatmul.mubr.f32.gmra.mrb[0].mxu0 %v1927
        %v2128 = vpop.f32.mrb[0].mxu0
        %v2129 = vadd.f32 %v1869, %v2128
        %v2130 = vpop.f32.mrb[0].mxu0
        %2131 = vmatprep.mubr.f32.mxu0 0.0
        %2132 = vmatmul.mubr.f32.gmra.mrb[0].mxu0 %v1930
        %v2133 = vpop.f32.mrb[0].mxu0
        %v2134 = vadd.f32 %v1869, %v2133
        %v2135 = vpop.f32.mrb[0].mxu0
        %2136 = vmatprep.mubr.f32.mxu0 0.0
        %2137 = vmatmul.mubr.f32.gmra.mrb[0].mxu0 %v1933
        %v2138 = vpop.f32.mrb[0].mxu0
        %v2139 = vadd.f32 %v1869, %v2138
        %v2140 = vpop.f32.mrb[0].mxu0
        %2141 = vmatprep.mubr.f32.mxu0 0.0
        %2142 = vmatmul.mubr.f32.gmra.mrb[0].mxu0 %v1936
        %v2143 = vpop.f32.mrb[0].mxu0
        %v2144 = vadd.f32 %v1869, %v2143
        %v2145 = vpop.f32.mrb[0].mxu0
        %2146 = vmatprep.mubr.f32.mxu0 0.0
        %2147 = vmatmul.mubr.f32.gmra.mrb[0].mxu0 %v1939
        %v2148 = vpop.f32.mrb[0].mxu0
        %v2149 = vadd.f32 %v1869, %v2148
        %v2150 = vpop.f32.mrb[0].mxu0
        %2151 = vmatprep.mubr.f32.mxu0 0.0
        %2152 = vmatmul.mubr.f32.gmra.mrb[0].mxu0 %v1942
        %v2153 = vpop.f32.mrb[0].mxu0
        %v2154 = vadd.f32 %v1869, %v2153
        %v2155 = vpop.f32.mrb[0].mxu0
        %2156 = vmatprep.mubr.f32.mxu0 0.0
        %2157 = vmatmul.mubr.f32.gmra.mrb[0].mxu0 %v1945
        %v2158 = vpop.f32.mrb[0].mxu0
        %v2159 = vadd.f32 %v1869, %v2158
        %v2160 = vpop.f32.mrb[0].mxu0
        %2161 = vmatprep.mubr.f32.mxu0 0.0
        %2162 = vmatmul.mubr.f32.gmra.mrb[0].mxu0 %v1948
        %v2163 = vpop.f32.mrb[0].mxu0
        %v2164 = vadd.f32 %v1869, %v2163
        %v2165 = vpop.f32.mrb[0].mxu0
        %2166 = vmatprep.mubr.f32.mxu0 0.0
        %2167 = vmatmul.mubr.f32.gmra.mrb[0].mxu0 %v1951
        %v2168 = vpop.f32.mrb[0].mxu0
        %v2169 = vadd.f32 %v1869, %v2168
        %v2170 = vpop.f32.mrb[0].mxu0
        %2171 = vmatprep.mubr.f32.mxu0 0.0
        %2172 = vmatmul.mubr.f32.gmra.mrb[0].mxu0 %v1954
        %v2173 = vpop.f32.mrb[0].mxu0
        %v2174 = vadd.f32 %v1869, %v2173
        %v2175 = vpop.f32.mrb[0].mxu0
        %2176 = vmatprep.mubr.f32.mxu0 0.0
        %2177 = vmatmul.mubr.f32.gmra.mrb[0].mxu0 %v1957
        %v2178 = vpop.f32.mrb[0].mxu0
        %v2179 = vadd.f32 %v1869, %v2178
        %v2180 = vpop.f32.mrb[0].mxu0
        %2181 = vmatprep.mubr.f32.mxu0 0.0
        %2182 = vmatmul.mubr.f32.gmra.mrb[0].mxu0 %v1960
        %v2183 = vpop.f32.mrb[0].mxu0
        %v2184 = vadd.f32 %v1869, %v2183
        %v2185 = vpop.f32.mrb[0].mxu0
        %2186 = vmatprep.mubr.f32.mxu0 0.0
        %2187 = vmatmul.mubr.f32.gmra.mrb[0].mxu0 %v1963
        %v2188 = vpop.f32.mrb[0].mxu0
        %v2189 = vadd.f32 %v1869, %v2188
        %v2190 = vpop.f32.mrb[0].mxu0
        %2191 = vmatprep.mubr.f32.mxu0 0.0
        %2192 = vmatmul.mubr.f32.gmra.mrb[0].mxu0 %v1966
        %v2193 = vpop.f32.mrb[0].mxu0
        %v2194 = vadd.f32 %v1869, %v2193
        %v2195 = vpop.f32.mrb[0].mxu0
        %2196 = vdwg.mxu0
        %v2197 = vmax.f32 %v2039, 0.0
        %v2198 = vmax.f32 %v2044, 0.0
        %v2199 = vmax.f32 %v2049, 0.0
        %v2200 = vmax.f32 %v2054, 0.0
        %v2201 = vmax.f32 %v2059, 0.0
        %v2202 = vmax.f32 %v2064, 0.0
        %v2203 = vmax.f32 %v2069, 0.0
        %v2204 = vmax.f32 %v2074, 0.0
        %v2205 = vmax.f32 %v2079, 0.0
        %v2206 = vmax.f32 %v2084, 0.0
        %v2207 = vmax.f32 %v2089, 0.0
        %v2208 = vmax.f32 %v2094, 0.0
        %v2209 = vmax.f32 %v2099, 0.0
        %v2210 = vmax.f32 %v2104, 0.0
        %v2211 = vmax.f32 %v2109, 0.0
        %v2212 = vmax.f32 %v2114, 0.0
        %v2213 = vmax.f32 %v2119, 0.0
        %v2214 = vmax.f32 %v2124, 0.0
        %v2215 = vmax.f32 %v2129, 0.0
        %v2216 = vmax.f32 %v2134, 0.0
        %v2217 = vmax.f32 %v2139, 0.0
        %v2218 = vmax.f32 %v2144, 0.0
        %v2219 = vmax.f32 %v2149, 0.0
        %v2220 = vmax.f32 %v2154, 0.0
        %v2221 = vmax.f32 %v2159, 0.0
        %v2222 = vmax.f32 %v2164, 0.0
        %v2223 = vmax.f32 %v2169, 0.0
        %v2224 = vmax.f32 %v2174, 0.0
        %v2225 = vmax.f32 %v2179, 0.0
        %v2226 = vmax.f32 %v2184, 0.0
        %v2227 = vmax.f32 %v2189, 0.0
        %v2228 = vmax.f32 %v2194, 0.0
        %2229 = vst [vmem:[%s272] sm:$0xff] %v2197
        %2230 = vst [vmem:[%s272 + $0x8] sm:$0xff] %v2198
        %2231 = vst [vmem:[%s272 + $0x10] sm:$0xff] %v2199
        %2232 = vst [vmem:[%s272 + $0x18] sm:$0xff] %v2200
        %2233 = vst [vmem:[%s272 + $0x20] sm:$0xff] %v2201
        %2234 = vst [vmem:[%s272 + $0x28] sm:$0xff] %v2202
        %2235 = vst [vmem:[%s272 + $0x30] sm:$0xff] %v2203
        %2236 = vst [vmem:[%s272 + $0x38] sm:$0xff] %v2204
        %2237 = vst [vmem:[%s272 + $0x40] sm:$0xff] %v2205
        %2238 = vst [vmem:[%s272 + $0x48] sm:$0xff] %v2206
        %2239 = vst [vmem:[%s272 + $0x50] sm:$0xff] %v2207
        %2240 = vst [vmem:[%s272 + $0x58] sm:$0xff] %v2208
        %2241 = vst [vmem:[%s272 + $0x60] sm:$0xff] %v2209
        %2242 = vst [vmem:[%s272 + $0x68] sm:$0xff] %v2210
        %2243 = vst [vmem:[%s272 + $0x70] sm:$0xff] %v2211
        %2244 = vst [vmem:[%s272 + $0x78] sm:$0xff] %v2212
        %2245 = vst [vmem:[%s272 + $0x80] sm:$0xff] %v2213
        %2246 = vst [vmem:[%s272 + $0x88] sm:$0xff] %v2214
        %2247 = vst [vmem:[%s272 + $0x90] sm:$0xff] %v2215
        %2248 = vst [vmem:[%s272 + $0x98] sm:$0xff] %v2216
        %2249 = vst [vmem:[%s272 + $0xa0] sm:$0xff] %v2217
        %2250 = vst [vmem:[%s272 + $0xa8] sm:$0xff] %v2218
        %2251 = vst [vmem:[%s272 + $0xb0] sm:$0xff] %v2219
        %2252 = vst [vmem:[%s272 + $0xb8] sm:$0xff] %v2220
        %2253 = vst [vmem:[%s272 + $0xc0] sm:$0xff] %v2221
        %2254 = vst [vmem:[%s272 + $0xc8] sm:$0xff] %v2222
        %2255 = vst [vmem:[%s272 + $0xd0] sm:$0xff] %v2223
        %2256 = vst [vmem:[%s272 + $0xd8] sm:$0xff] %v2224
        %2257 = vst [vmem:[%s272 + $0xe0] sm:$0xff] %v2225
        %2258 = vst [vmem:[%s272 + $0xe8] sm:$0xff] %v2226
        %2259 = vst [vmem:[%s272 + $0xf0] sm:$0xff] %v2227
        %2260 = vst [vmem:[%s272 + $0xf8] sm:$0xff] %v2228
        %s2261 = sand.u32 %s145, 1
        %s2262 = scalar_lea.sflag [#allocation4], %s2261
        %s2263 = sand.u32 %s145, 1
        %s2264 = smul.addr %s2263, 256
        %s2265 = scalar_lea.vmem [#allocation8], %s2264
        // Predicated region
        $region45: #{tpu_custom_call.1} parent=31 // pred_check
          %p2266 = pneg %p155
        $region46: #{tpu_custom_call.1} parent=31 // pred_check_branch
          %2268 = sbr.rel (%p2266) target = $region48
        $region47: #{tpu_custom_call.1} parent=31 // pred_region
          %s2269 = smul.u32 16, %s30
          %s2271 = ssub.s32 4096, 4096
          %2272 = vsyncadd %s2262, %s2271
          %s2273 = smul.addr %s2269, 2
          %s2274 = sadd.s32 %s29, %s2273
          %s2275 = smul.addr %s28, 32
          %s2276 = sadd.s32 %s2274, %s2275
          %s2277 = smul.addr %s27, 32
          %s2278 = sadd.s32 %s2276, %s2277
          %s2279 = smul.addr %s2278, 128
          %s2280 = scalar_lea.hbm %s3, %s2279
          %s2281 = sshll.u32 %s2265, 4
          %s2282 = int_to_ptr.vmem [resolvable:$true] %s2281
          %2287 = dma.vmem_to_hbm [thread:$0]  %s2282, 4096, %s2280, %s2262, 128, 128, 8
        $region48: #{tpu_custom_call.1} parent=31 // pred_fallthru
          _
      $region32: #{tpu_custom_call.1} parent=5 // pred_fallthru
        _
      %p2288 = scmp.le.s32.totalorder 2, %s16
      // Predicated region
      $region49: #{tpu_custom_call.1} parent=5 // pred_check
        %p2289 = pneg %p2288
      $region50: #{tpu_custom_call.1} parent=5 // pred_check_branch
        %2291 = sbr.rel (%p2289) target = $region52
      $region51: #{tpu_custom_call.1} parent=5 // pred_region
        %s2292 = ssub.s32 %s16, 2
        // Predicated region
        $region53: #{tpu_custom_call.1} parent=51 // pred_check
          %p2293 = pneg %p161
        $region54: #{tpu_custom_call.1} parent=51 // pred_check_branch
          %2295 = sbr.rel (%p2293) target = $region56
        $region55: #{tpu_custom_call.1} parent=51 // pred_region
          %s2296 = sand.u32 %s146, 1
          %s2297 = scalar_lea.sflag [#allocation4], %s2296
          %s2298 = sand.u32 %s146, 1
          %s2299 = smul.addr %s2298, 256
          %s2300 = scalar_lea.vmem [#allocation8], %s2299
          %2301 = dma.done %s2297, 4096
        $region56: #{tpu_custom_call.1} parent=51 // pred_fallthru
          _
      $region52: #{tpu_custom_call.1} parent=5 // pred_fallthru
        _
    $region6: #{tpu_custom_call.1} parent=1 // loop_footer
      %s20 = sadd.s32 1, %s16
    $region7: #{tpu_custom_call.1} parent=1 // loop_footer_branch
      %15 = sbr.rel target = $region3
    $region8: #{tpu_custom_call.1} parent=1 // loop_exit
      _
    %2302 = vsyncpa [#allocation3], 1
    %s2303 = scalar_lea.sflag [#allocation3], 1
    %2304 = vsyncpa %s2303, 1
    %2305 = vsyncpa [#allocation6], 1
    %2306 = vsyncpa [#allocation4], 1
    %s2307 = scalar_lea.sflag [#allocation4], 1
    %2308 = vsyncpa %s2307, 1

</llo_original>
